<compile_context>
chip_gen: v7x
topology: tpu7x:2x2x1
jax: 0.10.0
libtpu: 0.0.40
codegen_flags: <defaults>
</compile_context>

<pallas_src>
import functools

import jax
import jax.numpy as jnp
from jax.experimental import pallas as pl
from jax.experimental.pallas import tpu as pltpu

LN_EPS = 1e-5
WEIGHTS_FINAL_INIT = 0.003
BIAS_FINAL_INIT = 0.0003
BLOCK_B = 1024          # max batch rows per grid step
_ROW_ALIGN = 16         # row multiple (safe for bf16 sublane packing)


def _cdiv(a, b):
    return -(-a // b)


def _round_up(a, m):
    return _cdiv(a, m) * m


def _layernorm(h, gamma, beta):
    # Two independent lane reductions (mean, mean-of-squares) so the XLU work can
    # overlap across the three LayerNorms; f32 throughout (v5e has no bf16 VPU).
    mu = jnp.mean(h, axis=-1, keepdims=True)
    ms = jnp.mean(h * h, axis=-1, keepdims=True)
    var = ms - mu * mu
    return (h - mu) * jax.lax.rsqrt(var + LN_EPS) * gamma + beta


def _critic_kernel(xa_ref, w_ref, p_ref, o_ref, *, dims):
    ni, no, h0, h1, h2 = dims
    r1, r2, r3 = ni, ni + h0, ni + h0 + h1     # row offsets inside packed weights

    # Streamed activations: one bf16 tile holding [x | actions].
    x = xa_ref[:, 0:ni]            # (BB, ni)  bf16
    a = xa_ref[:, ni:ni + no]      # (BB, no)  bf16

    # Resident packed params (f32): rows b1,g1,be1, b2,g2,be2, b3,g3,be3, vw, vb.
    p = p_ref[...]
    b1, g1, be1 = p[0:1, 0:h0], p[1:2, 0:h0], p[2:3, 0:h0]
    b2, g2, be2 = p[3:4, 0:h1], p[4:5, 0:h1], p[5:6, 0:h1]
    b3, g3, be3 = p[6:7, 0:h2], p[7:8, 0:h2], p[8:9, 0:h2]
    vw, vb = p[9:10, 0:h2], p[10:11, 0:1]

    # Resident packed bf16 weights: rows [w1 | w2x | w3 | w2a] (16-aligned offsets
    # for the default sizes; static slices are cheap).
    w1 = w_ref[0:r1, 0:h0]
    w2x = w_ref[r1:r2, 0:h1]
    w3 = w_ref[r2:r3, 0:h2]
    w2a = w_ref[r3:r3 + no, 0:h1]

    # --- linear1 -> ln1 -> relu --- (bf16 MXU matmul, f32 accumulate + LN)
    h = jnp.dot(x, w1, preferred_element_type=jnp.float32) + b1
    h = jnp.maximum(_layernorm(h, g1, be1), 0.0)

    # --- cat((h, actions)) -> linear2 -> ln2 -> relu ---
    # [h | a] @ W2 == h @ W2[:h0] + a @ W2[h0:]   (exact, no lane concat)
    h = (jnp.dot(h.astype(jnp.bfloat16), w2x, preferred_element_type=jnp.float32)
         + jnp.dot(a, w2a, preferred_element_type=jnp.float32) + b2)
    h = jnp.maximum(_layernorm(h, g2, be2), 0.0)

    # --- linear3 -> ln3 -> relu ---
    h = jnp.dot(h.astype(jnp.bfloat16), w3, preferred_element_type=jnp.float32) + b3
    h = jnp.maximum(_layernorm(h, g3, be3), 0.0)

    # --- V head: (1, h2) @ (h2, BB) -> lane-dense (1, BB) row.
    # XLU transpose rides an otherwise idle slot; the output store/DMA becomes an
    # unmasked lane-dense row instead of a masked (BB, 1) column.
    v_row = jnp.dot(vw, h.T, preferred_element_type=jnp.float32) + vb
    o_ref[...] = v_row.reshape(1, 1, -1)


def _const_spec(shape):
    # Constant block index => the array stays VMEM-resident across batch tiles
    # (DMA'd once).  Single-buffer it when pipeline_mode is available.
    idx = lambda i: (0, 0)
    try:
        return pl.BlockSpec(shape, idx, pipeline_mode=pl.Buffered(1))
    except (TypeError, AttributeError):
        return pl.BlockSpec(shape, idx)


@functools.partial(jax.jit, static_argnums=(3, 4))
def _critic_pallas(xa, w_all, p_all, dims, block_b):
    b_pad, d_in = xa.shape
    nb = b_pad // block_b

    grid_spec = pltpu.PrefetchScalarGridSpec(
        num_scalar_prefetch=0,
        grid=(nb,),
        in_specs=[
            pl.BlockSpec((block_b, d_in), lambda i: (i, 0)),   # streamed bf16 [x|a]
            _const_spec(w_all.shape),                          # resident packed weights
            _const_spec(p_all.shape),                          # resident packed params
        ],
        # Lane-dense output: one (1, 1, block_b) row per grid step.
        out_specs=pl.BlockSpec((1, 1, block_b), lambda i: (i, 0, 0)),
    )
    return pl.pallas_call(
        functools.partial(_critic_kernel, dims=dims),
        out_shape=jax.ShapeDtypeStruct((nb, 1, block_b), jnp.float32),
        grid_spec=grid_spec,
        compiler_params=pltpu.CompilerParams(
            dimension_semantics=("parallel",)),   # shards batch tiles over v7x's 2 TCs
    )(xa, w_all, p_all)


def critic_forward(params, inputs, actions, *, block_b=BLOCK_B):
    """inputs: (num_inputs,) or (B, num_inputs); actions likewise.
    The 1-D call matches the torch forward exactly (returns shape (1,)); the 2-D
    call is the batched vmap of the per-sample forward (returns (B, 1))."""
    x = jnp.asarray(inputs, jnp.float32)
    a = jnp.asarray(actions, jnp.float32)
    squeeze = x.ndim == 1
    x = jnp.atleast_2d(x)
    a = jnp.atleast_2d(a)

    # One streamed bf16 input (halves HBM read bytes; x/a are only MXU operands).
    xa = jnp.concatenate([x, a], axis=-1).astype(jnp.bfloat16)
    batch = xa.shape[0]

    # Big tiles to amortize per-step overhead, but keep >= 2 grid steps when the
    # batch allows it (v7x megacore); rows stay a multiple of 16.
    cap = max(_ROW_ALIGN, _round_up(_cdiv(batch, 2), _ROW_ALIGN))
    bb = max(_ROW_ALIGN, min(_round_up(block_b, _ROW_ALIGN), cap))
    nb = _cdiv(batch, bb)
    b_pad = nb * bb
    if b_pad != batch:
        xa = jnp.pad(xa, ((0, b_pad - batch), (0, 0)))

    v = _critic_pallas(xa, params["w"], params["p"], params["dims"], bb)
    v = v.reshape(b_pad, 1)[:batch]
    return v.reshape(1) if squeeze else v


def init_critic_params(key, num_inputs, hidden_size, num_outputs):
    """Mirrors the torch module's init:
      - nn.Linear weights use fan_in = in_features (weight.size(-1)); stored here
        transposed as (in, out) and cast to bf16.
      - biases use the module's fan_in_uniform_init default fan_in = bias.size(-1)
        (= out_features), exactly as the original code does.
    Matmul weights packed into one bf16 array [w1; w2x; w3; w2a]; bias/LN/V params
    packed into one (11, hmax) f32 array."""
    h0, h1, h2 = hidden_size
    hmax = max(h0, h1, h2)
    ks = jax.random.split(key, 8)

    def fan_in_uniform(k, shape, fan_in):
        w = 1.0 / jnp.sqrt(jnp.asarray(fan_in, jnp.float32))
        return jax.random.uniform(k, shape, jnp.float32, -w, w)

    w1 = fan_in_uniform(ks[0], (num_inputs, h0), num_inputs)
    b1 = fan_in_uniform(ks[1], (h0,), h0)
    w2 = fan_in_uniform(ks[2], (h0 + num_outputs, h1), h0 + num_outputs)
    b2 = fan_in_uniform(ks[3], (h1,), h1)
    w3 = fan_in_uniform(ks[4], (h1, h2), h1)
    b3 = fan_in_uniform(ks[5], (h2,), h2)
    wv = jax.random.uniform(ks[6], (h2,), jnp.float32,
                            -WEIGHTS_FINAL_INIT, WEIGHTS_FINAL_INIT)
    bv = jax.random.uniform(ks[7], (), jnp.float32,
                            -BIAS_FINAL_INIT, BIAS_FINAL_INIT)

    def pad_cols(w):
        return jnp.pad(w, ((0, 0), (0, hmax - w.shape[1])))

    w_all = jnp.concatenate(
        [pad_cols(w1), pad_cols(w2[:h0]), pad_cols(w3), pad_cols(w2[h0:])],
        axis=0).astype(jnp.bfloat16)

    def pad_vec(v):
        return jnp.pad(v, (0, hmax - v.shape[0]))

    ones = lambda h: pad_vec(jnp.ones((h,), jnp.float32))
    zeros = lambda h: pad_vec(jnp.zeros((h,), jnp.float32))
    p_all = jnp.stack([
        pad_vec(b1), ones(h0), zeros(h0),
        pad_vec(b2), ones(h1), zeros(h1),
        pad_vec(b3), ones(h2), zeros(h2),
        pad_vec(wv), jnp.full((hmax,), bv, jnp.float32),
    ], axis=0)

    return {"w": w_all, "p": p_all,
            "dims": (num_inputs, num_outputs, h0, h1, h2)}


def critic_reference(params, inputs, actions):
    """Pure-JAX reference of the torch forward (same bf16 matmul precision)."""
    ni, no, h0, h1, h2 = params["dims"]
    W, P = params["w"], params["p"]
    r1, r2, r3 = ni, ni + h0, ni + h0 + h1
    w1, w2x = W[0:r1, 0:h0], W[r1:r2, 0:h1]
    w3, w2a = W[r2:r3, 0:h2], W[r3:r3 + no, 0:h1]

    x0 = jnp.asarray(inputs, jnp.float32)
    squeeze = x0.ndim == 1
    x = jnp.atleast_2d(x0).astype(jnp.bfloat16)
    a = jnp.atleast_2d(jnp.asarray(actions, jnp.float32)).astype(jnp.bfloat16)

    h = jnp.dot(x, w1, preferred_element_type=jnp.float32) + P[0:1, 0:h0]
    h = jnp.maximum(_layernorm(h, P[1:2, 0:h0], P[2:3, 0:h0]), 0.0)
    h = (jnp.dot(h.astype(jnp.bfloat16), w2x, preferred_element_type=jnp.float32)
         + jnp.dot(a, w2a, preferred_element_type=jnp.float32) + P[3:4, 0:h1])
    h = jnp.maximum(_layernorm(h, P[4:5, 0:h1], P[5:6, 0:h1]), 0.0)
    h = jnp.dot(h.astype(jnp.bfloat16), w3, preferred_element_type=jnp.float32) + P[6:7, 0:h2]
    h = jnp.maximum(_layernorm(h, P[7:8, 0:h2], P[8:9, 0:h2]), 0.0)
    v = jnp.sum(h * P[9:10, 0:h2], axis=-1, keepdims=True) + P[10, 0]
    return v.reshape(1) if squeeze else v


if __name__ == "__main__":
    num_inputs = 16
    hidden_size = [32, 32, 32]
    num_outputs = 4          # action_space.shape[0]
    batch = 256              # -> 2 grid steps of 128 rows (both TCs busy on v7x)

    key = jax.random.PRNGKey(0)
    kp, kx, ka = jax.random.split(key, 3)

    params = init_critic_params(kp, num_inputs, hidden_size, num_outputs)
    xs = jax.random.normal(kx, (batch, num_inputs), jnp.float32)
    acts = jax.random.normal(ka, (batch, num_outputs), jnp.float32)

    # Batched path (vmap of the module's per-sample forward).
    v = jax.block_until_ready(critic_forward(params, xs, acts))
    v_ref = critic_reference(params, xs, acts)
    assert v.shape == (batch, 1), v.shape
    assert jnp.allclose(v, v_ref, atol=1e-3, rtol=1e-3), (v[:4], v_ref[:4])

    # Original module semantics: 1-D inputs -> V of shape (1,).
    v1 = jax.block_until_ready(critic_forward(params, xs[0], acts[0]))
    assert v1.shape == (1,), v1.shape
    assert jnp.allclose(v1, v_ref[0], atol=1e-3, rtol=1e-3), (v1, v_ref[0])

    print("KERNEL_OK")
</pallas_src>

<mosaic_0001>
module attributes {stable_mosaic.version = 11 : i64} {
  func.func @_critic_kernel(%arg0: i32, %arg1: memref<128x20xbf16, #tpu.memory_space<vmem>>, %arg2: memref<84x32xbf16, #tpu.memory_space<vmem>>, %arg3: memref<11x32xf32, #tpu.memory_space<vmem>>, %arg4: memref<1x1x128xf32, #tpu.memory_space<vmem>>) attributes {dimension_semantics = [#tpu.dimension_semantics<parallel>], iteration_bounds = array<i64: 2>, scalar_prefetch = 0 : i64, scratch_operands = 0 : i64, tpu.core_type = #tpu.core_type<tc>, window_params = [{transform_indices = @transform_0, window_bounds = array<i64: 128, 20>}, {pipeline_mode = #tpu.pipeline_mode<synchronous>, transform_indices = @transform_1, window_bounds = array<i64: 84, 32>}, {pipeline_mode = #tpu.pipeline_mode<synchronous>, transform_indices = @transform_2, window_bounds = array<i64: 11, 32>}, {transform_indices = @transform_3, window_bounds = array<i64: 1, 1, 128>}]} {
    %c0 = arith.constant 0 : index
    %c0_0 = arith.constant 0 : index
    %0 = vector.load %arg1[%c0, %c0_0] : memref<128x20xbf16, #tpu.memory_space<vmem>>, vector<128x16xbf16>
    %c0_1 = arith.constant 0 : index
    %c16 = arith.constant 16 : index
    %1 = vector.load %arg1[%c0_1, %c16] : memref<128x20xbf16, #tpu.memory_space<vmem>>, vector<128x4xbf16>
    %c0_2 = arith.constant 0 : index
    %c0_3 = arith.constant 0 : index
    %2 = vector.load %arg3[%c0_2, %c0_3] : memref<11x32xf32, #tpu.memory_space<vmem>>, vector<11x32xf32>
    %3 = vector.extract_strided_slice %2 {offsets = [0, 0], sizes = [1, 32], strides = [1, 1]} : vector<11x32xf32> to vector<1x32xf32>
    %4 = vector.extract_strided_slice %2 {offsets = [1, 0], sizes = [1, 32], strides = [1, 1]} : vector<11x32xf32> to vector<1x32xf32>
    %5 = vector.extract_strided_slice %2 {offsets = [2, 0], sizes = [1, 32], strides = [1, 1]} : vector<11x32xf32> to vector<1x32xf32>
    %6 = vector.extract_strided_slice %2 {offsets = [3, 0], sizes = [1, 32], strides = [1, 1]} : vector<11x32xf32> to vector<1x32xf32>
    %7 = vector.extract_strided_slice %2 {offsets = [4, 0], sizes = [1, 32], strides = [1, 1]} : vector<11x32xf32> to vector<1x32xf32>
    %8 = vector.extract_strided_slice %2 {offsets = [5, 0], sizes = [1, 32], strides = [1, 1]} : vector<11x32xf32> to vector<1x32xf32>
    %9 = vector.extract_strided_slice %2 {offsets = [6, 0], sizes = [1, 32], strides = [1, 1]} : vector<11x32xf32> to vector<1x32xf32>
    %10 = vector.extract_strided_slice %2 {offsets = [7, 0], sizes = [1, 32], strides = [1, 1]} : vector<11x32xf32> to vector<1x32xf32>
    %11 = vector.extract_strided_slice %2 {offsets = [8, 0], sizes = [1, 32], strides = [1, 1]} : vector<11x32xf32> to vector<1x32xf32>
    %12 = vector.extract_strided_slice %2 {offsets = [9, 0], sizes = [1, 32], strides = [1, 1]} : vector<11x32xf32> to vector<1x32xf32>
    %13 = vector.extract_strided_slice %2 {offsets = [10, 0], sizes = [1, 1], strides = [1, 1]} : vector<11x32xf32> to vector<1x1xf32>
    %c0_4 = arith.constant 0 : index
    %c0_5 = arith.constant 0 : index
    %14 = vector.load %arg2[%c0_4, %c0_5] : memref<84x32xbf16, #tpu.memory_space<vmem>>, vector<16x32xbf16>
    %c16_6 = arith.constant 16 : index
    %c0_7 = arith.constant 0 : index
    %15 = vector.load %arg2[%c16_6, %c0_7] : memref<84x32xbf16, #tpu.memory_space<vmem>>, vector<32x32xbf16>
    %c48 = arith.constant 48 : index
    %c0_8 = arith.constant 0 : index
    %16 = vector.load %arg2[%c48, %c0_8] : memref<84x32xbf16, #tpu.memory_space<vmem>>, vector<32x32xbf16>
    %c80 = arith.constant 80 : index
    %c0_9 = arith.constant 0 : index
    %17 = vector.load %arg2[%c80, %c0_9] : memref<84x32xbf16, #tpu.memory_space<vmem>>, vector<4x32xbf16>
    %cst = arith.constant dense<0.000000e+00> : vector<128x32xf32>
    %18 = tpu.matmul %0, %14, %cst {dimension_numbers = #tpu.dot_dimension_numbers<[1], [0], [0], [1], [0, 0, 1, 1], [], []>} : vector<128x16xbf16>, vector<16x32xbf16>, vector<128x32xf32> -> vector<128x32xf32>
    %19 = vector.broadcast %3 : vector<1x32xf32> to vector<128x32xf32>
    %20 = arith.addf %18, %19 : vector<128x32xf32>
    %cst_10 = arith.constant dense<0.000000e+00> : vector<128xf32>
    %21 = vector.multi_reduction <add>, %20, %cst_10 [1] : vector<128x32xf32> to vector<128xf32>
    %22 = vector.shape_cast %21 : vector<128xf32> to vector<128x1xf32>
    %cst_11 = arith.constant 3.200000e+01 : f32
    %23 = vector.broadcast %cst_11 : f32 to vector<128x1xf32>
    %24 = arith.divf %22, %23 : vector<128x1xf32>
    %25 = arith.mulf %20, %20 : vector<128x32xf32>
    %cst_12 = arith.constant dense<0.000000e+00> : vector<128xf32>
    %26 = vector.multi_reduction <add>, %25, %cst_12 [1] : vector<128x32xf32> to vector<128xf32>
    %27 = vector.shape_cast %26 : vector<128xf32> to vector<128x1xf32>
    %cst_13 = arith.constant 3.200000e+01 : f32
    %28 = vector.broadcast %cst_13 : f32 to vector<128x1xf32>
    %29 = arith.divf %27, %28 : vector<128x1xf32>
    %30 = arith.mulf %24, %24 : vector<128x1xf32>
    %31 = arith.subf %29, %30 : vector<128x1xf32>
    %32 = vector.broadcast %24 : vector<128x1xf32> to vector<128x32xf32>
    %33 = arith.subf %20, %32 : vector<128x32xf32>
    %cst_14 = arith.constant 9.99999974E-6 : f32
    %34 = vector.broadcast %cst_14 : f32 to vector<128x1xf32>
    %35 = arith.addf %31, %34 : vector<128x1xf32>
    %36 = math.rsqrt %35 : vector<128x1xf32>
    %37 = vector.broadcast %36 : vector<128x1xf32> to vector<128x32xf32>
    %38 = arith.mulf %33, %37 : vector<128x32xf32>
    %39 = vector.broadcast %4 : vector<1x32xf32> to vector<128x32xf32>
    %40 = arith.mulf %38, %39 : vector<128x32xf32>
    %41 = vector.broadcast %5 : vector<1x32xf32> to vector<128x32xf32>
    %42 = arith.addf %40, %41 : vector<128x32xf32>
    %cst_15 = arith.constant 0.000000e+00 : f32
    %43 = vector.broadcast %cst_15 : f32 to vector<128x32xf32>
    %44 = arith.maximumf %42, %43 : vector<128x32xf32>
    %45 = arith.truncf %44 : vector<128x32xf32> to vector<128x32xbf16>
    %cst_16 = arith.constant dense<0.000000e+00> : vector<128x32xf32>
    %46 = tpu.matmul %45, %15, %cst_16 {dimension_numbers = #tpu.dot_dimension_numbers<[1], [0], [0], [1], [0, 0, 1, 1], [], []>} : vector<128x32xbf16>, vector<32x32xbf16>, vector<128x32xf32> -> vector<128x32xf32>
    %cst_17 = arith.constant dense<0.000000e+00> : vector<128x32xf32>
    %47 = tpu.matmul %1, %17, %cst_17 {dimension_numbers = #tpu.dot_dimension_numbers<[1], [0], [0], [1], [0, 0, 1, 1], [], []>} : vector<128x4xbf16>, vector<4x32xbf16>, vector<128x32xf32> -> vector<128x32xf32>
    %48 = arith.addf %46, %47 : vector<128x32xf32>
    %49 = vector.broadcast %6 : vector<1x32xf32> to vector<128x32xf32>
    %50 = arith.addf %48, %49 : vector<128x32xf32>
    %cst_18 = arith.constant dense<0.000000e+00> : vector<128xf32>
    %51 = vector.multi_reduction <add>, %50, %cst_18 [1] : vector<128x32xf32> to vector<128xf32>
    %52 = vector.shape_cast %51 : vector<128xf32> to vector<128x1xf32>
    %cst_19 = arith.constant 3.200000e+01 : f32
    %53 = vector.broadcast %cst_19 : f32 to vector<128x1xf32>
    %54 = arith.divf %52, %53 : vector<128x1xf32>
    %55 = arith.mulf %50, %50 : vector<128x32xf32>
    %cst_20 = arith.constant dense<0.000000e+00> : vector<128xf32>
    %56 = vector.multi_reduction <add>, %55, %cst_20 [1] : vector<128x32xf32> to vector<128xf32>
    %57 = vector.shape_cast %56 : vector<128xf32> to vector<128x1xf32>
    %cst_21 = arith.constant 3.200000e+01 : f32
    %58 = vector.broadcast %cst_21 : f32 to vector<128x1xf32>
    %59 = arith.divf %57, %58 : vector<128x1xf32>
    %60 = arith.mulf %54, %54 : vector<128x1xf32>
    %61 = arith.subf %59, %60 : vector<128x1xf32>
    %62 = vector.broadcast %54 : vector<128x1xf32> to vector<128x32xf32>
    %63 = arith.subf %50, %62 : vector<128x32xf32>
    %cst_22 = arith.constant 9.99999974E-6 : f32
    %64 = vector.broadcast %cst_22 : f32 to vector<128x1xf32>
    %65 = arith.addf %61, %64 : vector<128x1xf32>
    %66 = math.rsqrt %65 : vector<128x1xf32>
    %67 = vector.broadcast %66 : vector<128x1xf32> to vector<128x32xf32>
    %68 = arith.mulf %63, %67 : vector<128x32xf32>
    %69 = vector.broadcast %7 : vector<1x32xf32> to vector<128x32xf32>
    %70 = arith.mulf %68, %69 : vector<128x32xf32>
    %71 = vector.broadcast %8 : vector<1x32xf32> to vector<128x32xf32>
    %72 = arith.addf %70, %71 : vector<128x32xf32>
    %cst_23 = arith.constant 0.000000e+00 : f32
    %73 = vector.broadcast %cst_23 : f32 to vector<128x32xf32>
    %74 = arith.maximumf %72, %73 : vector<128x32xf32>
    %75 = arith.truncf %74 : vector<128x32xf32> to vector<128x32xbf16>
    %cst_24 = arith.constant dense<0.000000e+00> : vector<128x32xf32>
    %76 = tpu.matmul %75, %16, %cst_24 {dimension_numbers = #tpu.dot_dimension_numbers<[1], [0], [0], [1], [0, 0, 1, 1], [], []>} : vector<128x32xbf16>, vector<32x32xbf16>, vector<128x32xf32> -> vector<128x32xf32>
    %77 = vector.broadcast %9 : vector<1x32xf32> to vector<128x32xf32>
    %78 = arith.addf %76, %77 : vector<128x32xf32>
    %cst_25 = arith.constant dense<0.000000e+00> : vector<128xf32>
    %79 = vector.multi_reduction <add>, %78, %cst_25 [1] : vector<128x32xf32> to vector<128xf32>
    %80 = vector.shape_cast %79 : vector<128xf32> to vector<128x1xf32>
    %cst_26 = arith.constant 3.200000e+01 : f32
    %81 = vector.broadcast %cst_26 : f32 to vector<128x1xf32>
    %82 = arith.divf %80, %81 : vector<128x1xf32>
    %83 = arith.mulf %78, %78 : vector<128x32xf32>
    %cst_27 = arith.constant dense<0.000000e+00> : vector<128xf32>
    %84 = vector.multi_reduction <add>, %83, %cst_27 [1] : vector<128x32xf32> to vector<128xf32>
    %85 = vector.shape_cast %84 : vector<128xf32> to vector<128x1xf32>
    %cst_28 = arith.constant 3.200000e+01 : f32
    %86 = vector.broadcast %cst_28 : f32 to vector<128x1xf32>
    %87 = arith.divf %85, %86 : vector<128x1xf32>
    %88 = arith.mulf %82, %82 : vector<128x1xf32>
    %89 = arith.subf %87, %88 : vector<128x1xf32>
    %90 = vector.broadcast %82 : vector<128x1xf32> to vector<128x32xf32>
    %91 = arith.subf %78, %90 : vector<128x32xf32>
    %cst_29 = arith.constant 9.99999974E-6 : f32
    %92 = vector.broadcast %cst_29 : f32 to vector<128x1xf32>
    %93 = arith.addf %89, %92 : vector<128x1xf32>
    %94 = math.rsqrt %93 : vector<128x1xf32>
    %95 = vector.broadcast %94 : vector<128x1xf32> to vector<128x32xf32>
    %96 = arith.mulf %91, %95 : vector<128x32xf32>
    %97 = vector.broadcast %10 : vector<1x32xf32> to vector<128x32xf32>
    %98 = arith.mulf %96, %97 : vector<128x32xf32>
    %99 = vector.broadcast %11 : vector<1x32xf32> to vector<128x32xf32>
    %100 = arith.addf %98, %99 : vector<128x32xf32>
    %cst_30 = arith.constant 0.000000e+00 : f32
    %101 = vector.broadcast %cst_30 : f32 to vector<128x32xf32>
    %102 = arith.maximumf %100, %101 : vector<128x32xf32>
    %103 = tpu.transpose %102, [1, 0] : vector<128x32xf32> -> vector<32x128xf32>
    %cst_31 = arith.constant dense<0.000000e+00> : vector<1x128xf32>
    %104 = tpu.matmul %12, %103, %cst_31 {dimension_numbers = #tpu.dot_dimension_numbers<[1], [0], [0], [1], [0, 0, 1, 1], [], []>} : vector<1x32xf32>, vector<32x128xf32>, vector<1x128xf32> -> vector<1x128xf32>
    %105 = vector.broadcast %13 : vector<1x1xf32> to vector<1x128xf32>
    %106 = arith.addf %104, %105 : vector<1x128xf32>
    %107 = vector.shape_cast %106 : vector<1x128xf32> to vector<1x1x128xf32>
    %c0_32 = arith.constant 0 : index
    %c0_33 = arith.constant 0 : index
    %c0_34 = arith.constant 0 : index
    %108 = vector.load %arg4[%c0_32, %c0_33, %c0_34] : memref<1x1x128xf32, #tpu.memory_space<vmem>>, vector<1x1x128xf32>
    tpu.vector_store %arg4[%c0_32, %c0_33, %c0_34], %107 {strides = array<i32>} : memref<1x1x128xf32, #tpu.memory_space<vmem>>, vector<1x1x128xf32>,
    return
  }
  func.func @transform_0(%arg0: i32) -> (i32, i32) {
    %c0_i32 = arith.constant 0 : i32
    %c0_i32_0 = arith.constant 0 : i32
    return %arg0, %c0_i32 : i32, i32
  }
  func.func @transform_1(%arg0: i32) -> (i32, i32) {
    %c0_i32 = arith.constant 0 : i32
    %c0_i32_0 = arith.constant 0 : i32
    %c0_i32_1 = arith.constant 0 : i32
    return %c0_i32, %c0_i32_0 : i32, i32
  }
  func.func @transform_2(%arg0: i32) -> (i32, i32) {
    %c0_i32 = arith.constant 0 : i32
    %c0_i32_0 = arith.constant 0 : i32
    %c0_i32_1 = arith.constant 0 : i32
    return %c0_i32, %c0_i32_0 : i32, i32
  }
  func.func @transform_3(%arg0: i32) -> (i32, i32, i32) {
    %c0_i32 = arith.constant 0 : i32
    %c0_i32_0 = arith.constant 0 : i32
    %c0_i32_1 = arith.constant 0 : i32
    return %arg0, %c0_i32, %c0_i32_0 : i32, i32, i32
  }
}

</mosaic_0001>

<llo_original>
// kernel: _critic_pallas.1
$region0: #{_critic_pallas.1}
  #allocation0 [shape = 'u32[]', space=smem, size = 0x4, offset = 0x4, fixed_abs, tag = 'smem constant byte address 0x4 - core index']
  #allocation1 [shape = 'u32[144,128]{1,0:T(1,128)}', space=vmem, size = 0x12000, scoped, tag = 'internal scratch']
  %s0 = inlined_call_operand.vmem [shape: bf16[256,20], index: 0, kind: input, shape index: {}]
  %s1 = inlined_call_operand.vmem [shape: bf16[84,32], index: 1, kind: input, shape index: {}]
  %s2 = inlined_call_operand.vmem [shape: f32[11,32], index: 2, kind: input, shape index: {}]
  %s3 = inlined_call_operand.hbm [shape: f32[2,1,128], index: 3, kind: output, shape index: {}]
  %s4 = sld [smem:[#allocation0]]
  $region45: #{_critic_pallas.1} parent=0
    _
  %s6 = ssub.s32 1, %s4
  %s7 = scalar_select 0, %s6, %s4
  $region1: #{_critic_pallas.1} parent=0
    #allocation2 [shape = 'u8[1024]{0}', space=vmem, size = 0x400, scoped, tag = 'output window, operand 0']
    #allocation3 [shape = 's32[2]{0}', space=sflag, size = 0x8, scoped, tag = 'scoped memory for _critic_pallas.1']
    %8 = vsyncpa [#allocation3], 0
    %s9 = scalar_lea.sflag [#allocation3], 1
    %10 = vsyncpa %s9, 0
    loop: start=0, step=1, limit=4
    $region2: #{_critic_pallas.1} parent=1 // loop_pre_header
      _
    $region3: #{_critic_pallas.1} parent=1 // loop_header
      %s12 = sphi 0, %s16
      %p13 = scmp.ge.s32.totalorder %s12, 4
      %s22 = sphi 0, %s24
      %s25 = sphi 0, %s22
      %s26 = sphi 0, %s25
      %s42 = sphi 0, %s26
      %s46 = sphi 0, %s46
      %s48 = sphi 0, %s46
      %s49 = sphi 0, %s48
      %s63 = sphi 0, %s49
      %s67 = sphi 0, %s67
      %s69 = sphi 0, %s67
      %s70 = sphi 0, %s69
      %s84 = sphi 0, %s70
      %s90 = sphi 0, %s92
      %s93 = sphi 0, %s90
      %s94 = sphi 0, %s93
      %s110 = sphi 0, %s94
    $region4: #{_critic_pallas.1} parent=1 // loop_header_branch
      %15 = sbr.rel (%p13) target = $region8
    $region5: #{_critic_pallas.1} parent=1 // loop_body
      %s17 = ssub.s32 %s12, 1
      %s18 = ssub.s32 %s12, 2
      %s19 = sadd.s32 %s12, 1
      %s20 = ssub.s32 %s12, %s19
      %p21 = scmp.eq.s32.totalorder %s20, 0
      %s23 = sadd.s32 %s22, 1
      %s24 = scalar_select %p21, %s22, %s23
      %p27 = pneg %p21
      %p28 = scmp.eq.s32.totalorder %s12, 1
      %p29 = por %p27, %p28
      %p30 = scmp.ne.s32.totalorder %s22, %s25
      %p31 = scmp.eq.s32.totalorder %s12, 0
      %p32 = por %p30, %p31
      %p33 = scmp.ne.s32.totalorder %s22, %s25
      %p34 = scmp.eq.s32.totalorder %s17, 1
      %p35 = por %p33, %p34
      %p36 = scmp.ne.s32.totalorder %s25, %s26
      %p37 = scmp.eq.s32.totalorder %s17, 0
      %p38 = por %p36, %p37
      %p39 = scmp.ne.s32.totalorder %s25, %s26
      %p40 = scmp.eq.s32.totalorder %s18, 1
      %p41 = por %p39, %p40
      %p43 = scmp.ne.s32.totalorder %s26, %s42
      %p44 = scmp.eq.s32.totalorder %s18, 0
      %p45 = por %p43, %p44
      %s47 = sadd.s32 %s46, 1
      %p50 = scmp.eq.s32.totalorder %s12, 1
      %p51 = scmp.ne.s32.totalorder %s46, %s48
      %p52 = scmp.eq.s32.totalorder %s12, 0
      %p53 = por %p51, %p52
      %p54 = scmp.ne.s32.totalorder %s46, %s48
      %p55 = scmp.eq.s32.totalorder %s17, 1
      %p56 = por %p54, %p55
      %p57 = scmp.ne.s32.totalorder %s48, %s49
      %p58 = scmp.eq.s32.totalorder %s17, 0
      %p59 = por %p57, %p58
      %p60 = scmp.ne.s32.totalorder %s48, %s49
      %p61 = scmp.eq.s32.totalorder %s18, 1
      %p62 = por %p60, %p61
      %p64 = scmp.ne.s32.totalorder %s49, %s63
      %p65 = scmp.eq.s32.totalorder %s18, 0
      %p66 = por %p64, %p65
      %s68 = sadd.s32 %s67, 1
      %p71 = scmp.eq.s32.totalorder %s12, 1
      %p72 = scmp.ne.s32.totalorder %s67, %s69
      %p73 = scmp.eq.s32.totalorder %s12, 0
      %p74 = por %p72, %p73
      %p75 = scmp.ne.s32.totalorder %s67, %s69
      %p76 = scmp.eq.s32.totalorder %s17, 1
      %p77 = por %p75, %p76
      %p78 = scmp.ne.s32.totalorder %s69, %s70
      %p79 = scmp.eq.s32.totalorder %s17, 0
      %p80 = por %p78, %p79
      %p81 = scmp.ne.s32.totalorder %s69, %s70
      %p82 = scmp.eq.s32.totalorder %s18, 1
      %p83 = por %p81, %p82
      %p85 = scmp.ne.s32.totalorder %s70, %s84
      %p86 = scmp.eq.s32.totalorder %s18, 0
      %p87 = por %p85, %p86
      %s88 = ssub.s32 %s12, %s19
      %p89 = scmp.eq.s32.totalorder %s88, 0
      %s91 = sadd.s32 %s90, 1
      %s92 = scalar_select %p89, %s90, %s91
      %p95 = pneg %p89
      %p96 = scmp.eq.s32.totalorder %s12, 1
      %p97 = por %p95, %p96
      %p98 = scmp.ne.s32.totalorder %s90, %s93
      %p99 = scmp.eq.s32.totalorder %s12, 0
      %p100 = por %p98, %p99
      %p101 = scmp.ne.s32.totalorder %s90, %s93
      %p102 = scmp.eq.s32.totalorder %s17, 1
      %p103 = por %p101, %p102
      %p104 = scmp.ne.s32.totalorder %s93, %s94
      %p105 = scmp.eq.s32.totalorder %s17, 0
      %p106 = por %p104, %p105
      %p107 = scmp.ne.s32.totalorder %s93, %s94
      %p108 = scmp.eq.s32.totalorder %s18, 1
      %p109 = por %p107, %p108
      %p111 = scmp.ne.s32.totalorder %s94, %s110
      %p112 = scmp.eq.s32.totalorder %s18, 0
      %p113 = por %p111, %p112
      %p114 = scmp.le.s32.totalorder 1, %s12
      %p115 = scmp.lt.s32.totalorder %s12, 3
      %p116 = pnand %p114, %p115
      %p117 = pneg %p116
      // Predicated region
      $region9: #{_critic_pallas.1} parent=5 // pred_check
        _
      $region10: #{_critic_pallas.1} parent=5 // pred_check_branch
        %119 = sbr.rel (%p116) target = $region12
      $region11: #{_critic_pallas.1} parent=5 // pred_region
        %s120 = ssub.s32 %s12, 1
        // Predicated region
        $region13: #{_critic_pallas.1} parent=11 // pred_check
          %p121 = pneg %p59
        $region14: #{_critic_pallas.1} parent=11 // pred_check_branch
          %123 = sbr.rel (%p121) target = $region16
        $region15: #{_critic_pallas.1} parent=11 // pred_region
          _
        $region16: #{_critic_pallas.1} parent=11 // pred_fallthru
          _
        // Predicated region
        $region17: #{_critic_pallas.1} parent=11 // pred_check
          %p124 = pneg %p80
        $region18: #{_critic_pallas.1} parent=11 // pred_check_branch
          %126 = sbr.rel (%p124) target = $region20
        $region19: #{_critic_pallas.1} parent=11 // pred_region
          _
        $region20: #{_critic_pallas.1} parent=11 // pred_fallthru
          _
      $region12: #{_critic_pallas.1} parent=5 // pred_fallthru
        _
      %p127 = scmp.lt.s32.totalorder %s12, 2
      // Predicated region
      $region21: #{_critic_pallas.1} parent=5 // pred_check
        %p128 = pneg %p127
      $region22: #{_critic_pallas.1} parent=5 // pred_check_branch
        %130 = sbr.rel (%p128) target = $region24
      $region23: #{_critic_pallas.1} parent=5 // pred_region
        // Predicated region
        $region25: #{_critic_pallas.1} parent=23 // pred_check
          %p131 = pneg %p32
        $region26: #{_critic_pallas.1} parent=23 // pred_check_branch
          %133 = sbr.rel (%p131) target = $region28
        $region27: #{_critic_pallas.1} parent=23 // pred_region
          %s134 = smul.u32 16, %s12
          %p135 = scmp.lt.s32.totalorder %s134, 31
          %s136 = scalar_select %p135, %s134, 31
          %s137 = smul.addr %s136, 4
          %s138 = scalar_lea.vmem %s0, %s137
          %s139 = smul.u32 16, %s12
        $region28: #{_critic_pallas.1} parent=23 // pred_fallthru
          _
      $region24: #{_critic_pallas.1} parent=5 // pred_fallthru
        _
      %p140 = scmp.le.s32.totalorder 1, %s12
      %p141 = scmp.lt.s32.totalorder %s12, 3
      %p142 = pnand %p140, %p141
      %p143 = pneg %p142
      // Predicated region
      $region29: #{_critic_pallas.1} parent=5 // pred_check
        _
      $region30: #{_critic_pallas.1} parent=5 // pred_check_branch
        %145 = sbr.rel (%p142) target = $region32
      $region31: #{_critic_pallas.1} parent=5 // pred_region
        %s146 = ssub.s32 %s12, 1
        %s147 = smul.u32 16, %s17
        %p148 = scmp.lt.s32.totalorder %s147, 31
        %s149 = scalar_select %p148, %s147, 31
        %s150 = smul.addr %s149, 4
        %s151 = scalar_lea.vmem %s0, %s150
        %p152 = pneg %p38
        %p153 = pneg %p35
        %p154 = pneg %p59
        %p155 = pneg %p56
        %p156 = pneg %p80
        %p157 = pneg %p77
        %p158 = pneg %p106
        %p159 = pneg %p103
        %s160 = sand.u32 %s93, 1
        %s161 = scalar_lea.sflag [#allocation3], %s160
        %s162 = sand.u32 %s93, 1
        %s163 = scalar_lea.vmem [#allocation2], %s162
        %s164 = smul.u32 16, %s17
        %p165 = scmp.lt.s32.totalorder %s164, 31
        %s166 = scalar_select %p165, %s164, 31
        %s167 = smul.addr %s166, 4
        %s168 = scalar_lea.vmem %s0, %s167
        %s169 = smul.u32 16, %s17
        %v171 = vld [vmem:[%s168] sm:$0xf]
        %v172 = vld [vmem:[%s168 + $0x4] sm:$0xf]
        %v173 = vld [vmem:[%s168 + $0x8] sm:$0xf]
        %v174 = vld [vmem:[%s168 + $0xc] sm:$0xf]
        %v175 = vld [vmem:[%s168 + $0x10] sm:$0xf]
        %v176 = vld [vmem:[%s168 + $0x14] sm:$0xf]
        %v177 = vld [vmem:[%s168 + $0x18] sm:$0xf]
        %v178 = vld [vmem:[%s168 + $0x1c] sm:$0xf]
        %v179 = vld [vmem:[%s168 + $0x20] sm:$0xf]
        %v180 = vld [vmem:[%s168 + $0x24] sm:$0xf]
        %v181 = vld [vmem:[%s168 + $0x28] sm:$0xf]
        %v182 = vld [vmem:[%s168 + $0x2c] sm:$0xf]
        %v183 = vld [vmem:[%s168 + $0x30] sm:$0xf]
        %v184 = vld [vmem:[%s168 + $0x34] sm:$0xf]
        %v185 = vld [vmem:[%s168 + $0x38] sm:$0xf]
        %v186 = vld [vmem:[%s168 + $0x3c] sm:$0xf]
        %v187 = vld [vmem:[%s2] sm:$0xff]
        %v188 = vld [vmem:[%s2 + $0x8] sm:$0x7]
        %v189 = vld [vmem:[%s1] sm:$0xf]
        %v190 = vld [vmem:[%s1 + $0x4] sm:$0xf]
        %v191 = vld [vmem:[%s1 + $0x8] sm:$0xf]
        %v192 = vld [vmem:[%s1 + $0xc] sm:$0xf]
        %v193 = vld [vmem:[%s1 + $0x10] sm:$0xf]
        %v194 = vld [vmem:[%s1 + $0x14] sm:$0xf]
        %v195 = vld [vmem:[%s1 + $0x18] sm:$0xf]
        %v196 = vld [vmem:[%s1 + $0x1c] sm:$0xf]
        %v197 = vld [vmem:[%s1 + $0x20] sm:$0xf]
        %v198 = vld [vmem:[%s1 + $0x24] sm:$0xf]
        %v199 = vld [vmem:[%s1 + $0x28] sm:$0x3]
        %v200 = vlaneseq
        %v201 = vshrl.u32 %v200, 7
        %v202 = vsub.s32 0, %v201
        %v203 = vrot.slane %v187, %v202
        %v220 = vunpack.c.l.b16 %v171
        %v221 = vunpack.c.l.b16 %v172
        %v222 = vunpack.c.l.b16 %v173
        %v223 = vunpack.c.l.b16 %v174
        %v224 = vunpack.c.l.b16 %v175
        %v225 = vunpack.c.l.b16 %v176
        %v226 = vunpack.c.l.b16 %v177
        %v227 = vunpack.c.l.b16 %v178
        %v228 = vunpack.c.l.b16 %v179
        %v229 = vunpack.c.l.b16 %v180
        %v230 = vunpack.c.l.b16 %v181
        %v231 = vunpack.c.l.b16 %v182
        %v232 = vunpack.c.l.b16 %v183
        %v233 = vunpack.c.l.b16 %v184
        %v234 = vunpack.c.l.b16 %v185
        %v235 = vunpack.c.l.b16 %v186
        %v236 = vpack.c.b16 %v221, %v220
        %v237 = vpack.c.b16 %v223, %v222
        %v238 = vpack.c.b16 %v225, %v224
        %v239 = vpack.c.b16 %v227, %v226
        %v240 = vpack.c.b16 %v229, %v228
        %v241 = vpack.c.b16 %v231, %v230
        %v242 = vpack.c.b16 %v233, %v232
        %v243 = vpack.c.b16 %v235, %v234
        %v246 = vunpack.c.l.b16 %v189
        %v247 = vunpack.c.l.b16 %v190
        %v248 = vpack.c.b16 %v247, %v246
        %vm250 = vcmask 130048
        %v252 = vsel %vm250, %v236, 0
        %v255 = vsel %vm250, %v237, 0
        %v258 = vsel %vm250, %v238, 0
        %v261 = vsel %vm250, %v239, 0
        %v264 = vsel %vm250, %v240, 0
        %v267 = vsel %vm250, %v241, 0
        %v270 = vsel %vm250, %v242, 0
        %v273 = vsel %vm250, %v243, 0
        %275 = vmatprep.subr.bf16.mxu0 0
        %276 = vmatpush1.bf16.msra.mxu0 %v248
        %277 = vmatprep.subr.bf16.mxu0 0
        %278 = vmatpush1.bf16.msra.mxu0 0
        %279 = vmatprep.subr.bf16.mxu0 0
        %280 = vmatpush1.bf16.msra.mxu0 0
        %281 = vmatprep.subr.bf16.mxu0 0
        %282 = vmatpush1.bf16.msra.mxu0 0
        %283 = vmatprep.subr.bf16.mxu0 0
        %284 = vmatpush1.bf16.msra.mxu0 0
        %285 = vmatprep.subr.bf16.mxu0 0
        %286 = vmatpush1.bf16.msra.mxu0 0
        %287 = vmatprep.subr.bf16.mxu0 0
        %288 = vmatpush1.bf16.msra.mxu0 0
        %289 = vmatprep.subr.bf16.mxu0 0
        %290 = vmatpush1.bf16.msra.mxu0 0
        %291 = vmatprep.subr.bf16.mxu0 0
        %292 = vmatpush1.bf16.msra.mxu0 0
        %293 = vmatprep.subr.bf16.mxu0 0
        %294 = vmatpush1.bf16.msra.mxu0 0
        %295 = vmatprep.subr.bf16.mxu0 0
        %296 = vmatpush1.bf16.msra.mxu0 0
        %297 = vmatprep.subr.bf16.mxu0 0
        %298 = vmatpush1.bf16.msra.mxu0 0
        %299 = vmatprep.subr.bf16.mxu0 0
        %300 = vmatpush1.bf16.msra.mxu0 0
        %301 = vmatprep.subr.bf16.mxu0 0
        %302 = vmatpush1.bf16.msra.mxu0 0
        %303 = vmatprep.subr.bf16.mxu0 0
        %304 = vmatpush1.bf16.msra.mxu0 0
        %305 = vmatprep.subr.bf16.mxu0 0
        %306 = vmatpush1.bf16.msra.mxu0 0
        %307 = vmatprep.mubr.bf16.mxu0 0
        %308 = vmatmul.mubr.bf16.gmra.mrb[0].mxu0 %v252
        %v309 = vpop.f32.mrb[0].mxu0
        %v310 = vadd.f32 %v203, %v309
        %v311 = vpop.f32.mrb[0].mxu0
        %v312 = vpop.f32.mrb[0].mxu0
        %v313 = vadd.f32 %v203, %v312
        %v314 = vpop.f32.mrb[0].mxu0
        %315 = vmatprep.mubr.bf16.mxu0 0
        %316 = vmatmul.mubr.bf16.gmra.mrb[0].mxu0 %v255
        %v317 = vpop.f32.mrb[0].mxu0
        %v318 = vadd.f32 %v203, %v317
        %v319 = vpop.f32.mrb[0].mxu0
        %v320 = vpop.f32.mrb[0].mxu0
        %v321 = vadd.f32 %v203, %v320
        %v322 = vpop.f32.mrb[0].mxu0
        %323 = vmatprep.mubr.bf16.mxu0 0
        %324 = vmatmul.mubr.bf16.gmra.mrb[0].mxu0 %v258
        %v325 = vpop.f32.mrb[0].mxu0
        %v326 = vadd.f32 %v203, %v325
        %v327 = vpop.f32.mrb[0].mxu0
        %v328 = vpop.f32.mrb[0].mxu0
        %v329 = vadd.f32 %v203, %v328
        %v330 = vpop.f32.mrb[0].mxu0
        %331 = vmatprep.mubr.bf16.mxu0 0
        %332 = vmatmul.mubr.bf16.gmra.mrb[0].mxu0 %v261
        %v333 = vpop.f32.mrb[0].mxu0
        %v334 = vadd.f32 %v203, %v333
        %v335 = vpop.f32.mrb[0].mxu0
        %v336 = vpop.f32.mrb[0].mxu0
        %v337 = vadd.f32 %v203, %v336
        %v338 = vpop.f32.mrb[0].mxu0
        %339 = vmatprep.mubr.bf16.mxu0 0
        %340 = vmatmul.mubr.bf16.gmra.mrb[0].mxu0 %v264
        %v341 = vpop.f32.mrb[0].mxu0
        %v342 = vadd.f32 %v203, %v341
        %v343 = vpop.f32.mrb[0].mxu0
        %v344 = vpop.f32.mrb[0].mxu0
        %v345 = vadd.f32 %v203, %v344
        %v346 = vpop.f32.mrb[0].mxu0
        %347 = vmatprep.mubr.bf16.mxu0 0
        %348 = vmatmul.mubr.bf16.gmra.mrb[0].mxu0 %v267
        %v349 = vpop.f32.mrb[0].mxu0
        %v350 = vadd.f32 %v203, %v349
        %v351 = vpop.f32.mrb[0].mxu0
        %v352 = vpop.f32.mrb[0].mxu0
        %v353 = vadd.f32 %v203, %v352
        %v354 = vpop.f32.mrb[0].mxu0
        %355 = vmatprep.mubr.bf16.mxu0 0
        %356 = vmatmul.mubr.bf16.gmra.mrb[0].mxu0 %v270
        %v357 = vpop.f32.mrb[0].mxu0
        %v358 = vadd.f32 %v203, %v357
        %v359 = vpop.f32.mrb[0].mxu0
        %v360 = vpop.f32.mrb[0].mxu0
        %v361 = vadd.f32 %v203, %v360
        %v362 = vpop.f32.mrb[0].mxu0
        %363 = vmatprep.mubr.bf16.mxu0 0
        %364 = vmatmul.mubr.bf16.gmra.mrb[0].mxu0 %v273
        %v365 = vpop.f32.mrb[0].mxu0
        %v366 = vadd.f32 %v203, %v365
        %v367 = vpop.f32.mrb[0].mxu0
        %v368 = vpop.f32.mrb[0].mxu0
        %v369 = vadd.f32 %v203, %v368
        %v370 = vpop.f32.mrb[0].mxu0
        %371 = vdwg.mxu0
        %vm372 = vcmask 261120
        %v373 = vsel %vm372, %v310, 0.0
        %374 = vadd.xlane.f32.xlu0 %v373
        %v375 = vpop.xlane.xlu0 %374
        %v376 = vsel %vm372, %v313, 0.0
        %377 = vadd.xlane.f32.xlu0 %v376
        %v378 = vpop.xlane.xlu0 %377
        %v379 = vsel %vm372, %v318, 0.0
        %380 = vadd.xlane.f32.xlu0 %v379
        %v381 = vpop.xlane.xlu0 %380
        %v382 = vsel %vm372, %v321, 0.0
        %383 = vadd.xlane.f32.xlu0 %v382
        %v384 = vpop.xlane.xlu0 %383
        %v385 = vsel %vm372, %v326, 0.0
        %386 = vadd.xlane.f32.xlu0 %v385
        %v387 = vpop.xlane.xlu0 %386
        %v388 = vsel %vm372, %v329, 0.0
        %389 = vadd.xlane.f32.xlu0 %v388
        %v390 = vpop.xlane.xlu0 %389
        %v391 = vsel %vm372, %v334, 0.0
        %392 = vadd.xlane.f32.xlu0 %v391
        %v393 = vpop.xlane.xlu0 %392
        %v394 = vsel %vm372, %v337, 0.0
        %395 = vadd.xlane.f32.xlu0 %v394
        %v396 = vpop.xlane.xlu0 %395
        %v397 = vsel %vm372, %v342, 0.0
        %398 = vadd.xlane.f32.xlu0 %v397
        %v399 = vpop.xlane.xlu0 %398
        %v400 = vsel %vm372, %v345, 0.0
        %401 = vadd.xlane.f32.xlu0 %v400
        %v402 = vpop.xlane.xlu0 %401
        %v403 = vsel %vm372, %v350, 0.0
        %404 = vadd.xlane.f32.xlu0 %v403
        %v405 = vpop.xlane.xlu0 %404
        %v406 = vsel %vm372, %v353, 0.0
        %407 = vadd.xlane.f32.xlu0 %v406
        %v408 = vpop.xlane.xlu0 %407
        %v409 = vsel %vm372, %v358, 0.0
        %410 = vadd.xlane.f32.xlu0 %v409
        %v411 = vpop.xlane.xlu0 %410
        %v412 = vsel %vm372, %v361, 0.0
        %413 = vadd.xlane.f32.xlu0 %v412
        %v414 = vpop.xlane.xlu0 %413
        %v415 = vsel %vm372, %v366, 0.0
        %416 = vadd.xlane.f32.xlu0 %v415
        %v417 = vpop.xlane.xlu0 %416
        %v418 = vsel %vm372, %v369, 0.0
        %419 = vadd.xlane.f32.xlu0 %v418
        %v420 = vpop.xlane.xlu0 %419
        %v421 = vrcp.pop 32.0
        %v422 = vmul.f32 %v375, %v421
        %v423 = vmul.f32 %v378, %v421
        %v424 = vmul.f32 %v381, %v421
        %v425 = vmul.f32 %v384, %v421
        %v426 = vmul.f32 %v387, %v421
        %v427 = vmul.f32 %v390, %v421
        %v428 = vmul.f32 %v393, %v421
        %v429 = vmul.f32 %v396, %v421
        %v430 = vmul.f32 %v399, %v421
        %v431 = vmul.f32 %v402, %v421
        %v432 = vmul.f32 %v405, %v421
        %v433 = vmul.f32 %v408, %v421
        %v434 = vmul.f32 %v411, %v421
        %v435 = vmul.f32 %v414, %v421
        %v436 = vmul.f32 %v417, %v421
        %v437 = vmul.f32 %v420, %v421
        %v438 = vmul.f32 %v310, %v310
        %v439 = vmul.f32 %v313, %v313
        %v440 = vmul.f32 %v318, %v318
        %v441 = vmul.f32 %v321, %v321
        %v442 = vmul.f32 %v326, %v326
        %v443 = vmul.f32 %v329, %v329
        %v444 = vmul.f32 %v334, %v334
        %v445 = vmul.f32 %v337, %v337
        %v446 = vmul.f32 %v342, %v342
        %v447 = vmul.f32 %v345, %v345
        %v448 = vmul.f32 %v350, %v350
        %v449 = vmul.f32 %v353, %v353
        %v450 = vmul.f32 %v358, %v358
        %v451 = vmul.f32 %v361, %v361
        %v452 = vmul.f32 %v366, %v366
        %v453 = vmul.f32 %v369, %v369
        %v454 = vsel %vm372, %v438, 0.0
        %455 = vadd.xlane.f32.xlu0 %v454
        %v456 = vpop.xlane.xlu0 %455
        %v457 = vsel %vm372, %v439, 0.0
        %458 = vadd.xlane.f32.xlu0 %v457
        %v459 = vpop.xlane.xlu0 %458
        %v460 = vsel %vm372, %v440, 0.0
        %461 = vadd.xlane.f32.xlu0 %v460
        %v462 = vpop.xlane.xlu0 %461
        %v463 = vsel %vm372, %v441, 0.0
        %464 = vadd.xlane.f32.xlu0 %v463
        %v465 = vpop.xlane.xlu0 %464
        %v466 = vsel %vm372, %v442, 0.0
        %467 = vadd.xlane.f32.xlu0 %v466
        %v468 = vpop.xlane.xlu0 %467
        %v469 = vsel %vm372, %v443, 0.0
        %470 = vadd.xlane.f32.xlu0 %v469
        %v471 = vpop.xlane.xlu0 %470
        %v472 = vsel %vm372, %v444, 0.0
        %473 = vadd.xlane.f32.xlu0 %v472
        %v474 = vpop.xlane.xlu0 %473
        %v475 = vsel %vm372, %v445, 0.0
        %476 = vadd.xlane.f32.xlu0 %v475
        %v477 = vpop.xlane.xlu0 %476
        %v478 = vsel %vm372, %v446, 0.0
        %479 = vadd.xlane.f32.xlu0 %v478
        %v480 = vpop.xlane.xlu0 %479
        %v481 = vsel %vm372, %v447, 0.0
        %482 = vadd.xlane.f32.xlu0 %v481
        %v483 = vpop.xlane.xlu0 %482
        %v484 = vsel %vm372, %v448, 0.0
        %485 = vadd.xlane.f32.xlu0 %v484
        %v486 = vpop.xlane.xlu0 %485
        %v487 = vsel %vm372, %v449, 0.0
        %488 = vadd.xlane.f32.xlu0 %v487
        %v489 = vpop.xlane.xlu0 %488
        %v490 = vsel %vm372, %v450, 0.0
        %491 = vadd.xlane.f32.xlu0 %v490
        %v492 = vpop.xlane.xlu0 %491
        %v493 = vsel %vm372, %v451, 0.0
        %494 = vadd.xlane.f32.xlu0 %v493
        %v495 = vpop.xlane.xlu0 %494
        %v496 = vsel %vm372, %v452, 0.0
        %497 = vadd.xlane.f32.xlu0 %v496
        %v498 = vpop.xlane.xlu0 %497
        %v499 = vsel %vm372, %v453, 0.0
        %500 = vadd.xlane.f32.xlu0 %v499
        %v501 = vpop.xlane.xlu0 %500
        %v502 = vmul.f32 %v456, %v421
        %v503 = vmul.f32 %v459, %v421
        %v504 = vmul.f32 %v462, %v421
        %v505 = vmul.f32 %v465, %v421
        %v506 = vmul.f32 %v468, %v421
        %v507 = vmul.f32 %v471, %v421
        %v508 = vmul.f32 %v474, %v421
        %v509 = vmul.f32 %v477, %v421
        %v510 = vmul.f32 %v480, %v421
        %v511 = vmul.f32 %v483, %v421
        %v512 = vmul.f32 %v486, %v421
        %v513 = vmul.f32 %v489, %v421
        %v514 = vmul.f32 %v492, %v421
        %v515 = vmul.f32 %v495, %v421
        %v516 = vmul.f32 %v498, %v421
        %v517 = vmul.f32 %v501, %v421
        %v518 = vmul.f32 %v422, %v422
        %v519 = vmul.f32 %v423, %v423
        %v520 = vmul.f32 %v424, %v424
        %v521 = vmul.f32 %v425, %v425
        %v522 = vmul.f32 %v426, %v426
        %v523 = vmul.f32 %v427, %v427
        %v524 = vmul.f32 %v428, %v428
        %v525 = vmul.f32 %v429, %v429
        %v526 = vmul.f32 %v430, %v430
        %v527 = vmul.f32 %v431, %v431
        %v528 = vmul.f32 %v432, %v432
        %v529 = vmul.f32 %v433, %v433
        %v530 = vmul.f32 %v434, %v434
        %v531 = vmul.f32 %v435, %v435
        %v532 = vmul.f32 %v436, %v436
        %v533 = vmul.f32 %v437, %v437
        %v534 = vsub.f32 %v502, %v518
        %v535 = vsub.f32 %v503, %v519
        %v536 = vsub.f32 %v504, %v520
        %v537 = vsub.f32 %v505, %v521
        %v538 = vsub.f32 %v506, %v522
        %v539 = vsub.f32 %v507, %v523
        %v540 = vsub.f32 %v508, %v524
        %v541 = vsub.f32 %v509, %v525
        %v542 = vsub.f32 %v510, %v526
        %v543 = vsub.f32 %v511, %v527
        %v544 = vsub.f32 %v512, %v528
        %v545 = vsub.f32 %v513, %v529
        %v546 = vsub.f32 %v514, %v530
        %v547 = vsub.f32 %v515, %v531
        %v548 = vsub.f32 %v516, %v532
        %v549 = vsub.f32 %v517, %v533
        %v550 = vsub.f32 %v310, %v422
        %v551 = vsub.f32 %v313, %v423
        %v552 = vsub.f32 %v318, %v424
        %v553 = vsub.f32 %v321, %v425
        %v554 = vsub.f32 %v326, %v426
        %v555 = vsub.f32 %v329, %v427
        %v556 = vsub.f32 %v334, %v428
        %v557 = vsub.f32 %v337, %v429
        %v558 = vsub.f32 %v342, %v430
        %v559 = vsub.f32 %v345, %v431
        %v560 = vsub.f32 %v350, %v432
        %v561 = vsub.f32 %v353, %v433
        %v562 = vsub.f32 %v358, %v434
        %v563 = vsub.f32 %v361, %v435
        %v564 = vsub.f32 %v366, %v436
        %v565 = vsub.f32 %v369, %v437
        %v566 = vadd.f32 %v534, 1e-05
        %v567 = vadd.f32 %v535, 1e-05
        %v568 = vadd.f32 %v536, 1e-05
        %v569 = vadd.f32 %v537, 1e-05
        %v570 = vadd.f32 %v538, 1e-05
        %v571 = vadd.f32 %v539, 1e-05
        %v572 = vadd.f32 %v540, 1e-05
        %v573 = vadd.f32 %v541, 1e-05
        %v574 = vadd.f32 %v542, 1e-05
        %v575 = vadd.f32 %v543, 1e-05
        %v576 = vadd.f32 %v544, 1e-05
        %v577 = vadd.f32 %v545, 1e-05
        %v578 = vadd.f32 %v546, 1e-05
        %v579 = vadd.f32 %v547, 1e-05
        %v580 = vadd.f32 %v548, 1e-05
        %v581 = vadd.f32 %v549, 1e-05
        %v582 = vrsqrt.pop %v566
        %v583 = vrsqrt.pop %v567
        %v584 = vrsqrt.pop %v568
        %v585 = vrsqrt.pop %v569
        %v586 = vrsqrt.pop %v570
        %v587 = vrsqrt.pop %v571
        %v588 = vrsqrt.pop %v572
        %v589 = vrsqrt.pop %v573
        %v590 = vrsqrt.pop %v574
        %v591 = vrsqrt.pop %v575
        %v592 = vrsqrt.pop %v576
        %v593 = vrsqrt.pop %v577
        %v594 = vrsqrt.pop %v578
        %v595 = vrsqrt.pop %v579
        %v596 = vrsqrt.pop %v580
        %v597 = vrsqrt.pop %v581
        %v598 = vmul.f32 %v550, %v582
        %v599 = vmul.f32 %v551, %v583
        %v600 = vmul.f32 %v552, %v584
        %v601 = vmul.f32 %v553, %v585
        %v602 = vmul.f32 %v554, %v586
        %v603 = vmul.f32 %v555, %v587
        %v604 = vmul.f32 %v556, %v588
        %v605 = vmul.f32 %v557, %v589
        %v606 = vmul.f32 %v558, %v590
        %v607 = vmul.f32 %v559, %v591
        %v608 = vmul.f32 %v560, %v592
        %v609 = vmul.f32 %v561, %v593
        %v610 = vmul.f32 %v562, %v594
        %v611 = vmul.f32 %v563, %v595
        %v612 = vmul.f32 %v564, %v596
        %v613 = vmul.f32 %v565, %v597
        %v614 = vlaneseq
        %v615 = vshrl.u32 %v614, 7
        %v616 = vsub.s32 1, %v615
        %v617 = vrot.slane %v187, %v616
        %v618 = vmul.f32 %v598, %v617
        %v619 = vmul.f32 %v599, %v617
        %v620 = vmul.f32 %v600, %v617
        %v621 = vmul.f32 %v601, %v617
        %v622 = vmul.f32 %v602, %v617
        %v623 = vmul.f32 %v603, %v617
        %v624 = vmul.f32 %v604, %v617
        %v625 = vmul.f32 %v605, %v617
        %v626 = vmul.f32 %v606, %v617
        %v627 = vmul.f32 %v607, %v617
        %v628 = vmul.f32 %v608, %v617
        %v629 = vmul.f32 %v609, %v617
        %v630 = vmul.f32 %v610, %v617
        %v631 = vmul.f32 %v611, %v617
        %v632 = vmul.f32 %v612, %v617
        %v633 = vmul.f32 %v613, %v617
        %v634 = vlaneseq
        %v635 = vshrl.u32 %v634, 7
        %v636 = vsub.s32 2, %v635
        %v637 = vrot.slane %v187, %v636
        %v638 = vadd.f32 %v618, %v637
        %v639 = vadd.f32 %v619, %v637
        %v640 = vadd.f32 %v620, %v637
        %v641 = vadd.f32 %v621, %v637
        %v642 = vadd.f32 %v622, %v637
        %v643 = vadd.f32 %v623, %v637
        %v644 = vadd.f32 %v624, %v637
        %v645 = vadd.f32 %v625, %v637
        %v646 = vadd.f32 %v626, %v637
        %v647 = vadd.f32 %v627, %v637
        %v648 = vadd.f32 %v628, %v637
        %v649 = vadd.f32 %v629, %v637
        %v650 = vadd.f32 %v630, %v637
        %v651 = vadd.f32 %v631, %v637
        %v652 = vadd.f32 %v632, %v637
        %v653 = vadd.f32 %v633, %v637
        %v654 = vmax.f32 %v638, 0.0
        %v655 = vmax.f32 %v639, 0.0
        %v656 = vmax.f32 %v640, 0.0
        %v657 = vmax.f32 %v641, 0.0
        %v658 = vmax.f32 %v642, 0.0
        %v659 = vmax.f32 %v643, 0.0
        %v660 = vmax.f32 %v644, 0.0
        %v661 = vmax.f32 %v645, 0.0
        %v662 = vmax.f32 %v646, 0.0
        %v663 = vmax.f32 %v647, 0.0
        %v664 = vmax.f32 %v648, 0.0
        %v665 = vmax.f32 %v649, 0.0
        %v666 = vmax.f32 %v650, 0.0
        %v667 = vmax.f32 %v651, 0.0
        %v668 = vmax.f32 %v652, 0.0
        %v669 = vmax.f32 %v653, 0.0
        %v670 = vpack.c.bf16 %v655, %v654
        %v671 = vpack.c.bf16 %v657, %v656
        %v672 = vpack.c.bf16 %v659, %v658
        %v673 = vpack.c.bf16 %v661, %v660
        %v674 = vpack.c.bf16 %v663, %v662
        %v675 = vpack.c.bf16 %v665, %v664
        %v676 = vpack.c.bf16 %v667, %v666
        %v677 = vpack.c.bf16 %v669, %v668
        %678 = vrot.lane.b32.xlu0 %v236, 112
        %v679 = vpop.permute.xlu0 %678
        %680 = vrot.lane.b32.xlu0 %v237, 112
        %v681 = vpop.permute.xlu0 %680
        %682 = vrot.lane.b32.xlu0 %v238, 112
        %v683 = vpop.permute.xlu0 %682
        %684 = vrot.lane.b32.xlu0 %v239, 112
        %v685 = vpop.permute.xlu0 %684
        %686 = vrot.lane.b32.xlu0 %v240, 112
        %v687 = vpop.permute.xlu0 %686
        %688 = vrot.lane.b32.xlu0 %v241, 112
        %v689 = vpop.permute.xlu0 %688
        %690 = vrot.lane.b32.xlu0 %v242, 112
        %v691 = vpop.permute.xlu0 %690
        %692 = vrot.lane.b32.xlu0 %v243, 112
        %v693 = vpop.permute.xlu0 %692
        %vm694 = vcmask 31744
        %v696 = vsel %vm694, %v679, 0
        %v699 = vsel %vm694, %v681, 0
        %v702 = vsel %vm694, %v683, 0
        %v705 = vsel %vm694, %v685, 0
        %v708 = vsel %vm694, %v687, 0
        %v711 = vsel %vm694, %v689, 0
        %v714 = vsel %vm694, %v691, 0
        %v717 = vsel %vm694, %v693, 0
        %vm719 = vcmask 1041408
        %v721 = vsel %vm719, %v199, 0
        %723 = vmatprep.subr.bf16.mxu0 0
        %724 = vmatpush1.bf16.msra.mxu0 %v721
        %725 = vmatprep.subr.bf16.mxu0 0
        %726 = vmatpush1.bf16.msra.mxu0 0
        %727 = vmatprep.subr.bf16.mxu0 0
        %728 = vmatpush1.bf16.msra.mxu0 0
        %729 = vmatprep.subr.bf16.mxu0 0
        %730 = vmatpush1.bf16.msra.mxu0 0
        %731 = vmatprep.subr.bf16.mxu0 0
        %732 = vmatpush1.bf16.msra.mxu0 0
        %733 = vmatprep.subr.bf16.mxu0 0
        %734 = vmatpush1.bf16.msra.mxu0 0
        %735 = vmatprep.subr.bf16.mxu0 0
        %736 = vmatpush1.bf16.msra.mxu0 0
        %737 = vmatprep.subr.bf16.mxu0 0
        %738 = vmatpush1.bf16.msra.mxu0 0
        %739 = vmatprep.subr.bf16.mxu0 0
        %740 = vmatpush1.bf16.msra.mxu0 0
        %741 = vmatprep.subr.bf16.mxu0 0
        %742 = vmatpush1.bf16.msra.mxu0 0
        %743 = vmatprep.subr.bf16.mxu0 0
        %744 = vmatpush1.bf16.msra.mxu0 0
        %745 = vmatprep.subr.bf16.mxu0 0
        %746 = vmatpush1.bf16.msra.mxu0 0
        %747 = vmatprep.subr.bf16.mxu0 0
        %748 = vmatpush1.bf16.msra.mxu0 0
        %749 = vmatprep.subr.bf16.mxu0 0
        %750 = vmatpush1.bf16.msra.mxu0 0
        %751 = vmatprep.subr.bf16.mxu0 0
        %752 = vmatpush1.bf16.msra.mxu0 0
        %753 = vmatprep.subr.bf16.mxu0 0
        %754 = vmatpush1.bf16.msra.mxu0 0
        %755 = vmatprep.mubr.bf16.mxu0 0
        %756 = vmatmul.mubr.bf16.gmra.mrb[0].mxu0 %v696
        %v757 = vpop.f32.mrb[0].mxu0
        %v758 = vadd.f32 0.0, %v757
        %v759 = vpop.f32.mrb[0].mxu0
        %v760 = vpop.f32.mrb[0].mxu0
        %v761 = vadd.f32 0.0, %v760
        %v762 = vpop.f32.mrb[0].mxu0
        %763 = vmatprep.mubr.bf16.mxu0 0
        %764 = vmatmul.mubr.bf16.gmra.mrb[0].mxu0 %v699
        %v765 = vpop.f32.mrb[0].mxu0
        %v766 = vadd.f32 0.0, %v765
        %v767 = vpop.f32.mrb[0].mxu0
        %v768 = vpop.f32.mrb[0].mxu0
        %v769 = vadd.f32 0.0, %v768
        %v770 = vpop.f32.mrb[0].mxu0
        %771 = vmatprep.mubr.bf16.mxu0 0
        %772 = vmatmul.mubr.bf16.gmra.mrb[0].mxu0 %v702
        %v773 = vpop.f32.mrb[0].mxu0
        %v774 = vadd.f32 0.0, %v773
        %v775 = vpop.f32.mrb[0].mxu0
        %v776 = vpop.f32.mrb[0].mxu0
        %v777 = vadd.f32 0.0, %v776
        %v778 = vpop.f32.mrb[0].mxu0
        %779 = vmatprep.mubr.bf16.mxu0 0
        %780 = vmatmul.mubr.bf16.gmra.mrb[0].mxu0 %v705
        %v781 = vpop.f32.mrb[0].mxu0
        %v782 = vadd.f32 0.0, %v781
        %v783 = vpop.f32.mrb[0].mxu0
        %v784 = vpop.f32.mrb[0].mxu0
        %v785 = vadd.f32 0.0, %v784
        %v786 = vpop.f32.mrb[0].mxu0
        %787 = vmatprep.mubr.bf16.mxu0 0
        %788 = vmatmul.mubr.bf16.gmra.mrb[0].mxu0 %v708
        %v789 = vpop.f32.mrb[0].mxu0
        %v790 = vadd.f32 0.0, %v789
        %v791 = vpop.f32.mrb[0].mxu0
        %v792 = vpop.f32.mrb[0].mxu0
        %v793 = vadd.f32 0.0, %v792
        %v794 = vpop.f32.mrb[0].mxu0
        %795 = vmatprep.mubr.bf16.mxu0 0
        %796 = vmatmul.mubr.bf16.gmra.mrb[0].mxu0 %v711
        %v797 = vpop.f32.mrb[0].mxu0
        %v798 = vadd.f32 0.0, %v797
        %v799 = vpop.f32.mrb[0].mxu0
        %v800 = vpop.f32.mrb[0].mxu0
        %v801 = vadd.f32 0.0, %v800
        %v802 = vpop.f32.mrb[0].mxu0
        %803 = vmatprep.mubr.bf16.mxu0 0
        %804 = vmatmul.mubr.bf16.gmra.mrb[0].mxu0 %v714
        %v805 = vpop.f32.mrb[0].mxu0
        %v806 = vadd.f32 0.0, %v805
        %v807 = vpop.f32.mrb[0].mxu0
        %v808 = vpop.f32.mrb[0].mxu0
        %v809 = vadd.f32 0.0, %v808
        %v810 = vpop.f32.mrb[0].mxu0
        %811 = vmatprep.mubr.bf16.mxu0 0
        %812 = vmatmul.mubr.bf16.gmra.mrb[0].mxu0 %v717
        %v813 = vpop.f32.mrb[0].mxu0
        %v814 = vadd.f32 0.0, %v813
        %v815 = vpop.f32.mrb[0].mxu0
        %v816 = vpop.f32.mrb[0].mxu0
        %v817 = vadd.f32 0.0, %v816
        %v818 = vpop.f32.mrb[0].mxu0
        %819 = vdwg.mxu0
        %v824 = vunpack.c.l.b16 %v191
        %v825 = vunpack.c.l.b16 %v192
        %v826 = vunpack.c.l.b16 %v193
        %v827 = vunpack.c.l.b16 %v194
        %v828 = vpack.c.b16 %v825, %v824
        %v829 = vpack.c.b16 %v827, %v826
        %v833 = vsel %vm372, %v670, 0
        %v836 = vsel %vm372, %v671, 0
        %v839 = vsel %vm372, %v672, 0
        %v842 = vsel %vm372, %v673, 0
        %v845 = vsel %vm372, %v674, 0
        %v848 = vsel %vm372, %v675, 0
        %v851 = vsel %vm372, %v676, 0
        %v854 = vsel %vm372, %v677, 0
        %856 = vmatprep.subr.bf16.mxu0 0
        %857 = vmatpush1.bf16.msra.mxu0 %v828
        %858 = vmatprep.subr.bf16.mxu0 0
        %859 = vmatpush1.bf16.msra.mxu0 %v829
        %860 = vmatprep.subr.bf16.mxu0 0
        %861 = vmatpush1.bf16.msra.mxu0 0
        %862 = vmatprep.subr.bf16.mxu0 0
        %863 = vmatpush1.bf16.msra.mxu0 0
        %864 = vmatprep.subr.bf16.mxu0 0
        %865 = vmatpush1.bf16.msra.mxu0 0
        %866 = vmatprep.subr.bf16.mxu0 0
        %867 = vmatpush1.bf16.msra.mxu0 0
        %868 = vmatprep.subr.bf16.mxu0 0
        %869 = vmatpush1.bf16.msra.mxu0 0
        %870 = vmatprep.subr.bf16.mxu0 0
        %871 = vmatpush1.bf16.msra.mxu0 0
        %872 = vmatprep.subr.bf16.mxu0 0
        %873 = vmatpush1.bf16.msra.mxu0 0
        %874 = vmatprep.subr.bf16.mxu0 0
        %875 = vmatpush1.bf16.msra.mxu0 0
        %876 = vmatprep.subr.bf16.mxu0 0
        %877 = vmatpush1.bf16.msra.mxu0 0
        %878 = vmatprep.subr.bf16.mxu0 0
        %879 = vmatpush1.bf16.msra.mxu0 0
        %880 = vmatprep.subr.bf16.mxu0 0
        %881 = vmatpush1.bf16.msra.mxu0 0
        %882 = vmatprep.subr.bf16.mxu0 0
        %883 = vmatpush1.bf16.msra.mxu0 0
        %884 = vmatprep.subr.bf16.mxu0 0
        %885 = vmatpush1.bf16.msra.mxu0 0
        %886 = vmatprep.subr.bf16.mxu0 0
        %887 = vmatpush1.bf16.msra.mxu0 0
        %888 = vmatprep.mubr.bf16.mxu0 0
        %889 = vmatmul.mubr.bf16.gmra.mrb[0].mxu0 %v833
        %v890 = vpop.f32.mrb[0].mxu0
        %v891 = vadd.f32 %v758, %v890
        %v892 = vpop.f32.mrb[0].mxu0
        %v893 = vpop.f32.mrb[0].mxu0
        %v894 = vadd.f32 %v761, %v893
        %v895 = vpop.f32.mrb[0].mxu0
        %896 = vmatprep.mubr.bf16.mxu0 0
        %897 = vmatmul.mubr.bf16.gmra.mrb[0].mxu0 %v836
        %v898 = vpop.f32.mrb[0].mxu0
        %v899 = vadd.f32 %v766, %v898
        %v900 = vpop.f32.mrb[0].mxu0
        %v901 = vpop.f32.mrb[0].mxu0
        %v902 = vadd.f32 %v769, %v901
        %v903 = vpop.f32.mrb[0].mxu0
        %904 = vmatprep.mubr.bf16.mxu0 0
        %905 = vmatmul.mubr.bf16.gmra.mrb[0].mxu0 %v839
        %v906 = vpop.f32.mrb[0].mxu0
        %v907 = vadd.f32 %v774, %v906
        %v908 = vpop.f32.mrb[0].mxu0
        %v909 = vpop.f32.mrb[0].mxu0
        %v910 = vadd.f32 %v777, %v909
        %v911 = vpop.f32.mrb[0].mxu0
        %912 = vmatprep.mubr.bf16.mxu0 0
        %913 = vmatmul.mubr.bf16.gmra.mrb[0].mxu0 %v842
        %v914 = vpop.f32.mrb[0].mxu0
        %v915 = vadd.f32 %v782, %v914
        %v916 = vpop.f32.mrb[0].mxu0
        %v917 = vpop.f32.mrb[0].mxu0
        %v918 = vadd.f32 %v785, %v917
        %v919 = vpop.f32.mrb[0].mxu0
        %920 = vmatprep.mubr.bf16.mxu0 0
        %921 = vmatmul.mubr.bf16.gmra.mrb[0].mxu0 %v845
        %v922 = vpop.f32.mrb[0].mxu0
        %v923 = vadd.f32 %v790, %v922
        %v924 = vpop.f32.mrb[0].mxu0
        %v925 = vpop.f32.mrb[0].mxu0
        %v926 = vadd.f32 %v793, %v925
        %v927 = vpop.f32.mrb[0].mxu0
        %928 = vmatprep.mubr.bf16.mxu0 0
        %929 = vmatmul.mubr.bf16.gmra.mrb[0].mxu0 %v848
        %v930 = vpop.f32.mrb[0].mxu0
        %v931 = vadd.f32 %v798, %v930
        %v932 = vpop.f32.mrb[0].mxu0
        %v933 = vpop.f32.mrb[0].mxu0
        %v934 = vadd.f32 %v801, %v933
        %v935 = vpop.f32.mrb[0].mxu0
        %936 = vmatprep.mubr.bf16.mxu0 0
        %937 = vmatmul.mubr.bf16.gmra.mrb[0].mxu0 %v851
        %v938 = vpop.f32.mrb[0].mxu0
        %v939 = vadd.f32 %v806, %v938
        %v940 = vpop.f32.mrb[0].mxu0
        %v941 = vpop.f32.mrb[0].mxu0
        %v942 = vadd.f32 %v809, %v941
        %v943 = vpop.f32.mrb[0].mxu0
        %944 = vmatprep.mubr.bf16.mxu0 0
        %945 = vmatmul.mubr.bf16.gmra.mrb[0].mxu0 %v854
        %v946 = vpop.f32.mrb[0].mxu0
        %v947 = vadd.f32 %v814, %v946
        %v948 = vpop.f32.mrb[0].mxu0
        %v949 = vpop.f32.mrb[0].mxu0
        %v950 = vadd.f32 %v817, %v949
        %v951 = vpop.f32.mrb[0].mxu0
        %952 = vdwg.mxu0
        %v953 = vlaneseq
        %v954 = vshrl.u32 %v953, 7
        %v955 = vsub.s32 3, %v954
        %v956 = vrot.slane %v187, %v955
        %v957 = vadd.f32 %v891, %v956
        %v958 = vadd.f32 %v894, %v956
        %v959 = vadd.f32 %v899, %v956
        %v960 = vadd.f32 %v902, %v956
        %v961 = vadd.f32 %v907, %v956
        %v962 = vadd.f32 %v910, %v956
        %v963 = vadd.f32 %v915, %v956
        %v964 = vadd.f32 %v918, %v956
        %v965 = vadd.f32 %v923, %v956
        %v966 = vadd.f32 %v926, %v956
        %v967 = vadd.f32 %v931, %v956
        %v968 = vadd.f32 %v934, %v956
        %v969 = vadd.f32 %v939, %v956
        %v970 = vadd.f32 %v942, %v956
        %v971 = vadd.f32 %v947, %v956
        %v972 = vadd.f32 %v950, %v956
        %v973 = vsel %vm372, %v957, 0.0
        %974 = vadd.xlane.f32.xlu0 %v973
        %v975 = vpop.xlane.xlu0 %974
        %v976 = vsel %vm372, %v958, 0.0
        %977 = vadd.xlane.f32.xlu0 %v976
        %v978 = vpop.xlane.xlu0 %977
        %v979 = vsel %vm372, %v959, 0.0
        %980 = vadd.xlane.f32.xlu0 %v979
        %v981 = vpop.xlane.xlu0 %980
        %v982 = vsel %vm372, %v960, 0.0
        %983 = vadd.xlane.f32.xlu0 %v982
        %v984 = vpop.xlane.xlu0 %983
        %v985 = vsel %vm372, %v961, 0.0
        %986 = vadd.xlane.f32.xlu0 %v985
        %v987 = vpop.xlane.xlu0 %986
        %v988 = vsel %vm372, %v962, 0.0
        %989 = vadd.xlane.f32.xlu0 %v988
        %v990 = vpop.xlane.xlu0 %989
        %v991 = vsel %vm372, %v963, 0.0
        %992 = vadd.xlane.f32.xlu0 %v991
        %v993 = vpop.xlane.xlu0 %992
        %v994 = vsel %vm372, %v964, 0.0
        %995 = vadd.xlane.f32.xlu0 %v994
        %v996 = vpop.xlane.xlu0 %995
        %v997 = vsel %vm372, %v965, 0.0
        %998 = vadd.xlane.f32.xlu0 %v997
        %v999 = vpop.xlane.xlu0 %998
        %v1000 = vsel %vm372, %v966, 0.0
        %1001 = vadd.xlane.f32.xlu0 %v1000
        %v1002 = vpop.xlane.xlu0 %1001
        %v1003 = vsel %vm372, %v967, 0.0
        %1004 = vadd.xlane.f32.xlu0 %v1003
        %v1005 = vpop.xlane.xlu0 %1004
        %v1006 = vsel %vm372, %v968, 0.0
        %1007 = vadd.xlane.f32.xlu0 %v1006
        %v1008 = vpop.xlane.xlu0 %1007
        %v1009 = vsel %vm372, %v969, 0.0
        %1010 = vadd.xlane.f32.xlu0 %v1009
        %v1011 = vpop.xlane.xlu0 %1010
        %v1012 = vsel %vm372, %v970, 0.0
        %1013 = vadd.xlane.f32.xlu0 %v1012
        %v1014 = vpop.xlane.xlu0 %1013
        %v1015 = vsel %vm372, %v971, 0.0
        %1016 = vadd.xlane.f32.xlu0 %v1015
        %v1017 = vpop.xlane.xlu0 %1016
        %v1018 = vsel %vm372, %v972, 0.0
        %1019 = vadd.xlane.f32.xlu0 %v1018
        %v1020 = vpop.xlane.xlu0 %1019
        %v1021 = vmul.f32 %v975, %v421
        %v1022 = vmul.f32 %v978, %v421
        %v1023 = vmul.f32 %v981, %v421
        %v1024 = vmul.f32 %v984, %v421
        %v1025 = vmul.f32 %v987, %v421
        %v1026 = vmul.f32 %v990, %v421
        %v1027 = vmul.f32 %v993, %v421
        %v1028 = vmul.f32 %v996, %v421
        %v1029 = vmul.f32 %v999, %v421
        %v1030 = vmul.f32 %v1002, %v421
        %v1031 = vmul.f32 %v1005, %v421
        %v1032 = vmul.f32 %v1008, %v421
        %v1033 = vmul.f32 %v1011, %v421
        %v1034 = vmul.f32 %v1014, %v421
        %v1035 = vmul.f32 %v1017, %v421
        %v1036 = vmul.f32 %v1020, %v421
        %v1037 = vmul.f32 %v957, %v957
        %v1038 = vmul.f32 %v958, %v958
        %v1039 = vmul.f32 %v959, %v959
        %v1040 = vmul.f32 %v960, %v960
        %v1041 = vmul.f32 %v961, %v961
        %v1042 = vmul.f32 %v962, %v962
        %v1043 = vmul.f32 %v963, %v963
        %v1044 = vmul.f32 %v964, %v964
        %v1045 = vmul.f32 %v965, %v965
        %v1046 = vmul.f32 %v966, %v966
        %v1047 = vmul.f32 %v967, %v967
        %v1048 = vmul.f32 %v968, %v968
        %v1049 = vmul.f32 %v969, %v969
        %v1050 = vmul.f32 %v970, %v970
        %v1051 = vmul.f32 %v971, %v971
        %v1052 = vmul.f32 %v972, %v972
        %v1053 = vsel %vm372, %v1037, 0.0
        %1054 = vadd.xlane.f32.xlu0 %v1053
        %v1055 = vpop.xlane.xlu0 %1054
        %v1056 = vsel %vm372, %v1038, 0.0
        %1057 = vadd.xlane.f32.xlu0 %v1056
        %v1058 = vpop.xlane.xlu0 %1057
        %v1059 = vsel %vm372, %v1039, 0.0
        %1060 = vadd.xlane.f32.xlu0 %v1059
        %v1061 = vpop.xlane.xlu0 %1060
        %v1062 = vsel %vm372, %v1040, 0.0
        %1063 = vadd.xlane.f32.xlu0 %v1062
        %v1064 = vpop.xlane.xlu0 %1063
        %v1065 = vsel %vm372, %v1041, 0.0
        %1066 = vadd.xlane.f32.xlu0 %v1065
        %v1067 = vpop.xlane.xlu0 %1066
        %v1068 = vsel %vm372, %v1042, 0.0
        %1069 = vadd.xlane.f32.xlu0 %v1068
        %v1070 = vpop.xlane.xlu0 %1069
        %v1071 = vsel %vm372, %v1043, 0.0
        %1072 = vadd.xlane.f32.xlu0 %v1071
        %v1073 = vpop.xlane.xlu0 %1072
        %v1074 = vsel %vm372, %v1044, 0.0
        %1075 = vadd.xlane.f32.xlu0 %v1074
        %v1076 = vpop.xlane.xlu0 %1075
        %v1077 = vsel %vm372, %v1045, 0.0
        %1078 = vadd.xlane.f32.xlu0 %v1077
        %v1079 = vpop.xlane.xlu0 %1078
        %v1080 = vsel %vm372, %v1046, 0.0
        %1081 = vadd.xlane.f32.xlu0 %v1080
        %v1082 = vpop.xlane.xlu0 %1081
        %v1083 = vsel %vm372, %v1047, 0.0
        %1084 = vadd.xlane.f32.xlu0 %v1083
        %v1085 = vpop.xlane.xlu0 %1084
        %v1086 = vsel %vm372, %v1048, 0.0
        %1087 = vadd.xlane.f32.xlu0 %v1086
        %v1088 = vpop.xlane.xlu0 %1087
        %v1089 = vsel %vm372, %v1049, 0.0
        %1090 = vadd.xlane.f32.xlu0 %v1089
        %v1091 = vpop.xlane.xlu0 %1090
        %v1092 = vsel %vm372, %v1050, 0.0
        %1093 = vadd.xlane.f32.xlu0 %v1092
        %v1094 = vpop.xlane.xlu0 %1093
        %v1095 = vsel %vm372, %v1051, 0.0
        %1096 = vadd.xlane.f32.xlu0 %v1095
        %v1097 = vpop.xlane.xlu0 %1096
        %v1098 = vsel %vm372, %v1052, 0.0
        %1099 = vadd.xlane.f32.xlu0 %v1098
        %v1100 = vpop.xlane.xlu0 %1099
        %v1101 = vmul.f32 %v1055, %v421
        %v1102 = vmul.f32 %v1058, %v421
        %v1103 = vmul.f32 %v1061, %v421
        %v1104 = vmul.f32 %v1064, %v421
        %v1105 = vmul.f32 %v1067, %v421
        %v1106 = vmul.f32 %v1070, %v421
        %v1107 = vmul.f32 %v1073, %v421
        %v1108 = vmul.f32 %v1076, %v421
        %v1109 = vmul.f32 %v1079, %v421
        %v1110 = vmul.f32 %v1082, %v421
        %v1111 = vmul.f32 %v1085, %v421
        %v1112 = vmul.f32 %v1088, %v421
        %v1113 = vmul.f32 %v1091, %v421
        %v1114 = vmul.f32 %v1094, %v421
        %v1115 = vmul.f32 %v1097, %v421
        %v1116 = vmul.f32 %v1100, %v421
        %v1117 = vmul.f32 %v1021, %v1021
        %v1118 = vmul.f32 %v1022, %v1022
        %v1119 = vmul.f32 %v1023, %v1023
        %v1120 = vmul.f32 %v1024, %v1024
        %v1121 = vmul.f32 %v1025, %v1025
        %v1122 = vmul.f32 %v1026, %v1026
        %v1123 = vmul.f32 %v1027, %v1027
        %v1124 = vmul.f32 %v1028, %v1028
        %v1125 = vmul.f32 %v1029, %v1029
        %v1126 = vmul.f32 %v1030, %v1030
        %v1127 = vmul.f32 %v1031, %v1031
        %v1128 = vmul.f32 %v1032, %v1032
        %v1129 = vmul.f32 %v1033, %v1033
        %v1130 = vmul.f32 %v1034, %v1034
        %v1131 = vmul.f32 %v1035, %v1035
        %v1132 = vmul.f32 %v1036, %v1036
        %v1133 = vsub.f32 %v1101, %v1117
        %v1134 = vsub.f32 %v1102, %v1118
        %v1135 = vsub.f32 %v1103, %v1119
        %v1136 = vsub.f32 %v1104, %v1120
        %v1137 = vsub.f32 %v1105, %v1121
        %v1138 = vsub.f32 %v1106, %v1122
        %v1139 = vsub.f32 %v1107, %v1123
        %v1140 = vsub.f32 %v1108, %v1124
        %v1141 = vsub.f32 %v1109, %v1125
        %v1142 = vsub.f32 %v1110, %v1126
        %v1143 = vsub.f32 %v1111, %v1127
        %v1144 = vsub.f32 %v1112, %v1128
        %v1145 = vsub.f32 %v1113, %v1129
        %v1146 = vsub.f32 %v1114, %v1130
        %v1147 = vsub.f32 %v1115, %v1131
        %v1148 = vsub.f32 %v1116, %v1132
        %v1149 = vsub.f32 %v957, %v1021
        %v1150 = vsub.f32 %v958, %v1022
        %v1151 = vsub.f32 %v959, %v1023
        %v1152 = vsub.f32 %v960, %v1024
        %v1153 = vsub.f32 %v961, %v1025
        %v1154 = vsub.f32 %v962, %v1026
        %v1155 = vsub.f32 %v963, %v1027
        %v1156 = vsub.f32 %v964, %v1028
        %v1157 = vsub.f32 %v965, %v1029
        %v1158 = vsub.f32 %v966, %v1030
        %v1159 = vsub.f32 %v967, %v1031
        %v1160 = vsub.f32 %v968, %v1032
        %v1161 = vsub.f32 %v969, %v1033
        %v1162 = vsub.f32 %v970, %v1034
        %v1163 = vsub.f32 %v971, %v1035
        %v1164 = vsub.f32 %v972, %v1036
        %v1165 = vadd.f32 %v1133, 1e-05
        %v1166 = vadd.f32 %v1134, 1e-05
        %v1167 = vadd.f32 %v1135, 1e-05
        %v1168 = vadd.f32 %v1136, 1e-05
        %v1169 = vadd.f32 %v1137, 1e-05
        %v1170 = vadd.f32 %v1138, 1e-05
        %v1171 = vadd.f32 %v1139, 1e-05
        %v1172 = vadd.f32 %v1140, 1e-05
        %v1173 = vadd.f32 %v1141, 1e-05
        %v1174 = vadd.f32 %v1142, 1e-05
        %v1175 = vadd.f32 %v1143, 1e-05
        %v1176 = vadd.f32 %v1144, 1e-05
        %v1177 = vadd.f32 %v1145, 1e-05
        %v1178 = vadd.f32 %v1146, 1e-05
        %v1179 = vadd.f32 %v1147, 1e-05
        %v1180 = vadd.f32 %v1148, 1e-05
        %v1181 = vrsqrt.pop %v1165
        %v1182 = vrsqrt.pop %v1166
        %v1183 = vrsqrt.pop %v1167
        %v1184 = vrsqrt.pop %v1168
        %v1185 = vrsqrt.pop %v1169
        %v1186 = vrsqrt.pop %v1170
        %v1187 = vrsqrt.pop %v1171
        %v1188 = vrsqrt.pop %v1172
        %v1189 = vrsqrt.pop %v1173
        %v1190 = vrsqrt.pop %v1174
        %v1191 = vrsqrt.pop %v1175
        %v1192 = vrsqrt.pop %v1176
        %v1193 = vrsqrt.pop %v1177
        %v1194 = vrsqrt.pop %v1178
        %v1195 = vrsqrt.pop %v1179
        %v1196 = vrsqrt.pop %v1180
        %v1197 = vmul.f32 %v1149, %v1181
        %v1198 = vmul.f32 %v1150, %v1182
        %v1199 = vmul.f32 %v1151, %v1183
        %v1200 = vmul.f32 %v1152, %v1184
        %v1201 = vmul.f32 %v1153, %v1185
        %v1202 = vmul.f32 %v1154, %v1186
        %v1203 = vmul.f32 %v1155, %v1187
        %v1204 = vmul.f32 %v1156, %v1188
        %v1205 = vmul.f32 %v1157, %v1189
        %v1206 = vmul.f32 %v1158, %v1190
        %v1207 = vmul.f32 %v1159, %v1191
        %v1208 = vmul.f32 %v1160, %v1192
        %v1209 = vmul.f32 %v1161, %v1193
        %v1210 = vmul.f32 %v1162, %v1194
        %v1211 = vmul.f32 %v1163, %v1195
        %v1212 = vmul.f32 %v1164, %v1196
        %v1213 = vlaneseq
        %v1214 = vshrl.u32 %v1213, 7
        %v1215 = vsub.s32 4, %v1214
        %v1216 = vrot.slane %v187, %v1215
        %v1217 = vmul.f32 %v1197, %v1216
        %v1218 = vmul.f32 %v1198, %v1216
        %v1219 = vmul.f32 %v1199, %v1216
        %v1220 = vmul.f32 %v1200, %v1216
        %v1221 = vmul.f32 %v1201, %v1216
        %v1222 = vmul.f32 %v1202, %v1216
        %v1223 = vmul.f32 %v1203, %v1216
        %v1224 = vmul.f32 %v1204, %v1216
        %v1225 = vmul.f32 %v1205, %v1216
        %v1226 = vmul.f32 %v1206, %v1216
        %v1227 = vmul.f32 %v1207, %v1216
        %v1228 = vmul.f32 %v1208, %v1216
        %v1229 = vmul.f32 %v1209, %v1216
        %v1230 = vmul.f32 %v1210, %v1216
        %v1231 = vmul.f32 %v1211, %v1216
        %v1232 = vmul.f32 %v1212, %v1216
        %v1233 = vlaneseq
        %v1234 = vshrl.u32 %v1233, 7
        %v1235 = vsub.s32 5, %v1234
        %v1236 = vrot.slane %v187, %v1235
        %v1237 = vadd.f32 %v1217, %v1236
        %v1238 = vadd.f32 %v1218, %v1236
        %v1239 = vadd.f32 %v1219, %v1236
        %v1240 = vadd.f32 %v1220, %v1236
        %v1241 = vadd.f32 %v1221, %v1236
        %v1242 = vadd.f32 %v1222, %v1236
        %v1243 = vadd.f32 %v1223, %v1236
        %v1244 = vadd.f32 %v1224, %v1236
        %v1245 = vadd.f32 %v1225, %v1236
        %v1246 = vadd.f32 %v1226, %v1236
        %v1247 = vadd.f32 %v1227, %v1236
        %v1248 = vadd.f32 %v1228, %v1236
        %v1249 = vadd.f32 %v1229, %v1236
        %v1250 = vadd.f32 %v1230, %v1236
        %v1251 = vadd.f32 %v1231, %v1236
        %v1252 = vadd.f32 %v1232, %v1236
        %v1253 = vmax.f32 %v1237, 0.0
        %v1254 = vmax.f32 %v1238, 0.0
        %v1255 = vmax.f32 %v1239, 0.0
        %v1256 = vmax.f32 %v1240, 0.0
        %v1257 = vmax.f32 %v1241, 0.0
        %v1258 = vmax.f32 %v1242, 0.0
        %v1259 = vmax.f32 %v1243, 0.0
        %v1260 = vmax.f32 %v1244, 0.0
        %v1261 = vmax.f32 %v1245, 0.0
        %v1262 = vmax.f32 %v1246, 0.0
        %v1263 = vmax.f32 %v1247, 0.0
        %v1264 = vmax.f32 %v1248, 0.0
        %v1265 = vmax.f32 %v1249, 0.0
        %v1266 = vmax.f32 %v1250, 0.0
        %v1267 = vmax.f32 %v1251, 0.0
        %v1268 = vmax.f32 %v1252, 0.0
        %v1269 = vpack.c.bf16 %v1254, %v1253
        %v1270 = vpack.c.bf16 %v1256, %v1255
        %v1271 = vpack.c.bf16 %v1258, %v1257
        %v1272 = vpack.c.bf16 %v1260, %v1259
        %v1273 = vpack.c.bf16 %v1262, %v1261
        %v1274 = vpack.c.bf16 %v1264, %v1263
        %v1275 = vpack.c.bf16 %v1266, %v1265
        %v1276 = vpack.c.bf16 %v1268, %v1267
        %v1277 = vlaneseq
        %v1278 = vshrl.u32 %v1277, 7
        %v1279 = vsub.s32 6, %v1278
        %v1280 = vrot.slane %v187, %v1279
        %v1285 = vunpack.c.l.b16 %v195
        %v1286 = vunpack.c.l.b16 %v196
        %v1287 = vunpack.c.l.b16 %v197
        %v1288 = vunpack.c.l.b16 %v198
        %v1289 = vpack.c.b16 %v1286, %v1285
        %v1290 = vpack.c.b16 %v1288, %v1287
        %v1294 = vsel %vm372, %v1269, 0
        %v1297 = vsel %vm372, %v1270, 0
        %v1300 = vsel %vm372, %v1271, 0
        %v1303 = vsel %vm372, %v1272, 0
        %v1306 = vsel %vm372, %v1273, 0
        %v1309 = vsel %vm372, %v1274, 0
        %v1312 = vsel %vm372, %v1275, 0
        %v1315 = vsel %vm372, %v1276, 0
        %1317 = vmatprep.subr.bf16.mxu0 0
        %1318 = vmatpush1.bf16.msra.mxu0 %v1289
        %1319 = vmatprep.subr.bf16.mxu0 0
        %1320 = vmatpush1.bf16.msra.mxu0 %v1290
        %1321 = vmatprep.subr.bf16.mxu0 0
        %1322 = vmatpush1.bf16.msra.mxu0 0
        %1323 = vmatprep.subr.bf16.mxu0 0
        %1324 = vmatpush1.bf16.msra.mxu0 0
        %1325 = vmatprep.subr.bf16.mxu0 0
        %1326 = vmatpush1.bf16.msra.mxu0 0
        %1327 = vmatprep.subr.bf16.mxu0 0
        %1328 = vmatpush1.bf16.msra.mxu0 0
        %1329 = vmatprep.subr.bf16.mxu0 0
        %1330 = vmatpush1.bf16.msra.mxu0 0
        %1331 = vmatprep.subr.bf16.mxu0 0
        %1332 = vmatpush1.bf16.msra.mxu0 0
        %1333 = vmatprep.subr.bf16.mxu0 0
        %1334 = vmatpush1.bf16.msra.mxu0 0
        %1335 = vmatprep.subr.bf16.mxu0 0
        %1336 = vmatpush1.bf16.msra.mxu0 0
        %1337 = vmatprep.subr.bf16.mxu0 0
        %1338 = vmatpush1.bf16.msra.mxu0 0
        %1339 = vmatprep.subr.bf16.mxu0 0
        %1340 = vmatpush1.bf16.msra.mxu0 0
        %1341 = vmatprep.subr.bf16.mxu0 0
        %1342 = vmatpush1.bf16.msra.mxu0 0
        %1343 = vmatprep.subr.bf16.mxu0 0
        %1344 = vmatpush1.bf16.msra.mxu0 0
        %1345 = vmatprep.subr.bf16.mxu0 0
        %1346 = vmatpush1.bf16.msra.mxu0 0
        %1347 = vmatprep.subr.bf16.mxu0 0
        %1348 = vmatpush1.bf16.msra.mxu0 0
        %1349 = vmatprep.mubr.bf16.mxu0 0
        %1350 = vmatmul.mubr.bf16.gmra.mrb[0].mxu0 %v1294
        %v1351 = vpop.f32.mrb[0].mxu0
        %v1352 = vadd.f32 %v1280, %v1351
        %v1353 = vpop.f32.mrb[0].mxu0
        %v1354 = vpop.f32.mrb[0].mxu0
        %v1355 = vadd.f32 %v1280, %v1354
        %v1356 = vpop.f32.mrb[0].mxu0
        %1357 = vmatprep.mubr.bf16.mxu0 0
        %1358 = vmatmul.mubr.bf16.gmra.mrb[0].mxu0 %v1297
        %v1359 = vpop.f32.mrb[0].mxu0
        %v1360 = vadd.f32 %v1280, %v1359
        %v1361 = vpop.f32.mrb[0].mxu0
        %v1362 = vpop.f32.mrb[0].mxu0
        %v1363 = vadd.f32 %v1280, %v1362
        %v1364 = vpop.f32.mrb[0].mxu0
        %1365 = vmatprep.mubr.bf16.mxu0 0
        %1366 = vmatmul.mubr.bf16.gmra.mrb[0].mxu0 %v1300
        %v1367 = vpop.f32.mrb[0].mxu0
        %v1368 = vadd.f32 %v1280, %v1367
        %v1369 = vpop.f32.mrb[0].mxu0
        %v1370 = vpop.f32.mrb[0].mxu0
        %v1371 = vadd.f32 %v1280, %v1370
        %v1372 = vpop.f32.mrb[0].mxu0
        %1373 = vmatprep.mubr.bf16.mxu0 0
        %1374 = vmatmul.mubr.bf16.gmra.mrb[0].mxu0 %v1303
        %v1375 = vpop.f32.mrb[0].mxu0
        %v1376 = vadd.f32 %v1280, %v1375
        %v1377 = vpop.f32.mrb[0].mxu0
        %v1378 = vpop.f32.mrb[0].mxu0
        %v1379 = vadd.f32 %v1280, %v1378
        %v1380 = vpop.f32.mrb[0].mxu0
        %1381 = vmatprep.mubr.bf16.mxu0 0
        %1382 = vmatmul.mubr.bf16.gmra.mrb[0].mxu0 %v1306
        %v1383 = vpop.f32.mrb[0].mxu0
        %v1384 = vadd.f32 %v1280, %v1383
        %v1385 = vpop.f32.mrb[0].mxu0
        %v1386 = vpop.f32.mrb[0].mxu0
        %v1387 = vadd.f32 %v1280, %v1386
        %v1388 = vpop.f32.mrb[0].mxu0
        %1389 = vmatprep.mubr.bf16.mxu0 0
        %1390 = vmatmul.mubr.bf16.gmra.mrb[0].mxu0 %v1309
        %v1391 = vpop.f32.mrb[0].mxu0
        %v1392 = vadd.f32 %v1280, %v1391
        %v1393 = vpop.f32.mrb[0].mxu0
        %v1394 = vpop.f32.mrb[0].mxu0
        %v1395 = vadd.f32 %v1280, %v1394
        %v1396 = vpop.f32.mrb[0].mxu0
        %1397 = vmatprep.mubr.bf16.mxu0 0
        %1398 = vmatmul.mubr.bf16.gmra.mrb[0].mxu0 %v1312
        %v1399 = vpop.f32.mrb[0].mxu0
        %v1400 = vadd.f32 %v1280, %v1399
        %v1401 = vpop.f32.mrb[0].mxu0
        %v1402 = vpop.f32.mrb[0].mxu0
        %v1403 = vadd.f32 %v1280, %v1402
        %v1404 = vpop.f32.mrb[0].mxu0
        %1405 = vmatprep.mubr.bf16.mxu0 0
        %1406 = vmatmul.mubr.bf16.gmra.mrb[0].mxu0 %v1315
        %v1407 = vpop.f32.mrb[0].mxu0
        %v1408 = vadd.f32 %v1280, %v1407
        %v1409 = vpop.f32.mrb[0].mxu0
        %v1410 = vpop.f32.mrb[0].mxu0
        %v1411 = vadd.f32 %v1280, %v1410
        %v1412 = vpop.f32.mrb[0].mxu0
        %1413 = vdwg.mxu0
        %v1414 = vsel %vm372, %v1352, 0.0
        %1415 = vadd.xlane.f32.xlu0 %v1414
        %v1416 = vpop.xlane.xlu0 %1415
        %v1417 = vsel %vm372, %v1355, 0.0
        %1418 = vadd.xlane.f32.xlu0 %v1417
        %v1419 = vpop.xlane.xlu0 %1418
        %v1420 = vsel %vm372, %v1360, 0.0
        %1421 = vadd.xlane.f32.xlu0 %v1420
        %v1422 = vpop.xlane.xlu0 %1421
        %v1423 = vsel %vm372, %v1363, 0.0
        %1424 = vadd.xlane.f32.xlu0 %v1423
        %v1425 = vpop.xlane.xlu0 %1424
        %v1426 = vsel %vm372, %v1368, 0.0
        %1427 = vadd.xlane.f32.xlu0 %v1426
        %v1428 = vpop.xlane.xlu0 %1427
        %v1429 = vsel %vm372, %v1371, 0.0
        %1430 = vadd.xlane.f32.xlu0 %v1429
        %v1431 = vpop.xlane.xlu0 %1430
        %v1432 = vsel %vm372, %v1376, 0.0
        %1433 = vadd.xlane.f32.xlu0 %v1432
        %v1434 = vpop.xlane.xlu0 %1433
        %v1435 = vsel %vm372, %v1379, 0.0
        %1436 = vadd.xlane.f32.xlu0 %v1435
        %v1437 = vpop.xlane.xlu0 %1436
        %v1438 = vsel %vm372, %v1384, 0.0
        %1439 = vadd.xlane.f32.xlu0 %v1438
        %v1440 = vpop.xlane.xlu0 %1439
        %v1441 = vsel %vm372, %v1387, 0.0
        %1442 = vadd.xlane.f32.xlu0 %v1441
        %v1443 = vpop.xlane.xlu0 %1442
        %v1444 = vsel %vm372, %v1392, 0.0
        %1445 = vadd.xlane.f32.xlu0 %v1444
        %v1446 = vpop.xlane.xlu0 %1445
        %v1447 = vsel %vm372, %v1395, 0.0
        %1448 = vadd.xlane.f32.xlu0 %v1447
        %v1449 = vpop.xlane.xlu0 %1448
        %v1450 = vsel %vm372, %v1400, 0.0
        %1451 = vadd.xlane.f32.xlu0 %v1450
        %v1452 = vpop.xlane.xlu0 %1451
        %v1453 = vsel %vm372, %v1403, 0.0
        %1454 = vadd.xlane.f32.xlu0 %v1453
        %v1455 = vpop.xlane.xlu0 %1454
        %v1456 = vsel %vm372, %v1408, 0.0
        %1457 = vadd.xlane.f32.xlu0 %v1456
        %v1458 = vpop.xlane.xlu0 %1457
        %v1459 = vsel %vm372, %v1411, 0.0
        %1460 = vadd.xlane.f32.xlu0 %v1459
        %v1461 = vpop.xlane.xlu0 %1460
        %v1462 = vmul.f32 %v1416, %v421
        %v1463 = vmul.f32 %v1419, %v421
        %v1464 = vmul.f32 %v1422, %v421
        %v1465 = vmul.f32 %v1425, %v421
        %v1466 = vmul.f32 %v1428, %v421
        %v1467 = vmul.f32 %v1431, %v421
        %v1468 = vmul.f32 %v1434, %v421
        %v1469 = vmul.f32 %v1437, %v421
        %v1470 = vmul.f32 %v1440, %v421
        %v1471 = vmul.f32 %v1443, %v421
        %v1472 = vmul.f32 %v1446, %v421
        %v1473 = vmul.f32 %v1449, %v421
        %v1474 = vmul.f32 %v1452, %v421
        %v1475 = vmul.f32 %v1455, %v421
        %v1476 = vmul.f32 %v1458, %v421
        %v1477 = vmul.f32 %v1461, %v421
        %v1478 = vmul.f32 %v1352, %v1352
        %v1479 = vmul.f32 %v1355, %v1355
        %v1480 = vmul.f32 %v1360, %v1360
        %v1481 = vmul.f32 %v1363, %v1363
        %v1482 = vmul.f32 %v1368, %v1368
        %v1483 = vmul.f32 %v1371, %v1371
        %v1484 = vmul.f32 %v1376, %v1376
        %v1485 = vmul.f32 %v1379, %v1379
        %v1486 = vmul.f32 %v1384, %v1384
        %v1487 = vmul.f32 %v1387, %v1387
        %v1488 = vmul.f32 %v1392, %v1392
        %v1489 = vmul.f32 %v1395, %v1395
        %v1490 = vmul.f32 %v1400, %v1400
        %v1491 = vmul.f32 %v1403, %v1403
        %v1492 = vmul.f32 %v1408, %v1408
        %v1493 = vmul.f32 %v1411, %v1411
        %v1494 = vsel %vm372, %v1478, 0.0
        %1495 = vadd.xlane.f32.xlu0 %v1494
        %v1496 = vpop.xlane.xlu0 %1495
        %v1497 = vsel %vm372, %v1479, 0.0
        %1498 = vadd.xlane.f32.xlu0 %v1497
        %v1499 = vpop.xlane.xlu0 %1498
        %v1500 = vsel %vm372, %v1480, 0.0
        %1501 = vadd.xlane.f32.xlu0 %v1500
        %v1502 = vpop.xlane.xlu0 %1501
        %v1503 = vsel %vm372, %v1481, 0.0
        %1504 = vadd.xlane.f32.xlu0 %v1503
        %v1505 = vpop.xlane.xlu0 %1504
        %v1506 = vsel %vm372, %v1482, 0.0
        %1507 = vadd.xlane.f32.xlu0 %v1506
        %v1508 = vpop.xlane.xlu0 %1507
        %v1509 = vsel %vm372, %v1483, 0.0
        %1510 = vadd.xlane.f32.xlu0 %v1509
        %v1511 = vpop.xlane.xlu0 %1510
        %v1512 = vsel %vm372, %v1484, 0.0
        %1513 = vadd.xlane.f32.xlu0 %v1512
        %v1514 = vpop.xlane.xlu0 %1513
        %v1515 = vsel %vm372, %v1485, 0.0
        %1516 = vadd.xlane.f32.xlu0 %v1515
        %v1517 = vpop.xlane.xlu0 %1516
        %v1518 = vsel %vm372, %v1486, 0.0
        %1519 = vadd.xlane.f32.xlu0 %v1518
        %v1520 = vpop.xlane.xlu0 %1519
        %v1521 = vsel %vm372, %v1487, 0.0
        %1522 = vadd.xlane.f32.xlu0 %v1521
        %v1523 = vpop.xlane.xlu0 %1522
        %v1524 = vsel %vm372, %v1488, 0.0
        %1525 = vadd.xlane.f32.xlu0 %v1524
        %v1526 = vpop.xlane.xlu0 %1525
        %v1527 = vsel %vm372, %v1489, 0.0
        %1528 = vadd.xlane.f32.xlu0 %v1527
        %v1529 = vpop.xlane.xlu0 %1528
        %v1530 = vsel %vm372, %v1490, 0.0
        %1531 = vadd.xlane.f32.xlu0 %v1530
        %v1532 = vpop.xlane.xlu0 %1531
        %v1533 = vsel %vm372, %v1491, 0.0
        %1534 = vadd.xlane.f32.xlu0 %v1533
        %v1535 = vpop.xlane.xlu0 %1534
        %v1536 = vsel %vm372, %v1492, 0.0
        %1537 = vadd.xlane.f32.xlu0 %v1536
        %v1538 = vpop.xlane.xlu0 %1537
        %v1539 = vsel %vm372, %v1493, 0.0
        %1540 = vadd.xlane.f32.xlu0 %v1539
        %v1541 = vpop.xlane.xlu0 %1540
        %v1542 = vmul.f32 %v1496, %v421
        %v1543 = vmul.f32 %v1499, %v421
        %v1544 = vmul.f32 %v1502, %v421
        %v1545 = vmul.f32 %v1505, %v421
        %v1546 = vmul.f32 %v1508, %v421
        %v1547 = vmul.f32 %v1511, %v421
        %v1548 = vmul.f32 %v1514, %v421
        %v1549 = vmul.f32 %v1517, %v421
        %v1550 = vmul.f32 %v1520, %v421
        %v1551 = vmul.f32 %v1523, %v421
        %v1552 = vmul.f32 %v1526, %v421
        %v1553 = vmul.f32 %v1529, %v421
        %v1554 = vmul.f32 %v1532, %v421
        %v1555 = vmul.f32 %v1535, %v421
        %v1556 = vmul.f32 %v1538, %v421
        %v1557 = vmul.f32 %v1541, %v421
        %v1558 = vmul.f32 %v1462, %v1462
        %v1559 = vmul.f32 %v1463, %v1463
        %v1560 = vmul.f32 %v1464, %v1464
        %v1561 = vmul.f32 %v1465, %v1465
        %v1562 = vmul.f32 %v1466, %v1466
        %v1563 = vmul.f32 %v1467, %v1467
        %v1564 = vmul.f32 %v1468, %v1468
        %v1565 = vmul.f32 %v1469, %v1469
        %v1566 = vmul.f32 %v1470, %v1470
        %v1567 = vmul.f32 %v1471, %v1471
        %v1568 = vmul.f32 %v1472, %v1472
        %v1569 = vmul.f32 %v1473, %v1473
        %v1570 = vmul.f32 %v1474, %v1474
        %v1571 = vmul.f32 %v1475, %v1475
        %v1572 = vmul.f32 %v1476, %v1476
        %v1573 = vmul.f32 %v1477, %v1477
        %v1574 = vsub.f32 %v1542, %v1558
        %v1575 = vsub.f32 %v1543, %v1559
        %v1576 = vsub.f32 %v1544, %v1560
        %v1577 = vsub.f32 %v1545, %v1561
        %v1578 = vsub.f32 %v1546, %v1562
        %v1579 = vsub.f32 %v1547, %v1563
        %v1580 = vsub.f32 %v1548, %v1564
        %v1581 = vsub.f32 %v1549, %v1565
        %v1582 = vsub.f32 %v1550, %v1566
        %v1583 = vsub.f32 %v1551, %v1567
        %v1584 = vsub.f32 %v1552, %v1568
        %v1585 = vsub.f32 %v1553, %v1569
        %v1586 = vsub.f32 %v1554, %v1570
        %v1587 = vsub.f32 %v1555, %v1571
        %v1588 = vsub.f32 %v1556, %v1572
        %v1589 = vsub.f32 %v1557, %v1573
        %v1590 = vsub.f32 %v1352, %v1462
        %v1591 = vsub.f32 %v1355, %v1463
        %v1592 = vsub.f32 %v1360, %v1464
        %v1593 = vsub.f32 %v1363, %v1465
        %v1594 = vsub.f32 %v1368, %v1466
        %v1595 = vsub.f32 %v1371, %v1467
        %v1596 = vsub.f32 %v1376, %v1468
        %v1597 = vsub.f32 %v1379, %v1469
        %v1598 = vsub.f32 %v1384, %v1470
        %v1599 = vsub.f32 %v1387, %v1471
        %v1600 = vsub.f32 %v1392, %v1472
        %v1601 = vsub.f32 %v1395, %v1473
        %v1602 = vsub.f32 %v1400, %v1474
        %v1603 = vsub.f32 %v1403, %v1475
        %v1604 = vsub.f32 %v1408, %v1476
        %v1605 = vsub.f32 %v1411, %v1477
        %v1606 = vadd.f32 %v1574, 1e-05
        %v1607 = vadd.f32 %v1575, 1e-05
        %v1608 = vadd.f32 %v1576, 1e-05
        %v1609 = vadd.f32 %v1577, 1e-05
        %v1610 = vadd.f32 %v1578, 1e-05
        %v1611 = vadd.f32 %v1579, 1e-05
        %v1612 = vadd.f32 %v1580, 1e-05
        %v1613 = vadd.f32 %v1581, 1e-05
        %v1614 = vadd.f32 %v1582, 1e-05
        %v1615 = vadd.f32 %v1583, 1e-05
        %v1616 = vadd.f32 %v1584, 1e-05
        %v1617 = vadd.f32 %v1585, 1e-05
        %v1618 = vadd.f32 %v1586, 1e-05
        %v1619 = vadd.f32 %v1587, 1e-05
        %v1620 = vadd.f32 %v1588, 1e-05
        %v1621 = vadd.f32 %v1589, 1e-05
        %v1622 = vrsqrt.pop %v1606
        %v1623 = vrsqrt.pop %v1607
        %v1624 = vrsqrt.pop %v1608
        %v1625 = vrsqrt.pop %v1609
        %v1626 = vrsqrt.pop %v1610
        %v1627 = vrsqrt.pop %v1611
        %v1628 = vrsqrt.pop %v1612
        %v1629 = vrsqrt.pop %v1613
        %v1630 = vrsqrt.pop %v1614
        %v1631 = vrsqrt.pop %v1615
        %v1632 = vrsqrt.pop %v1616
        %v1633 = vrsqrt.pop %v1617
        %v1634 = vrsqrt.pop %v1618
        %v1635 = vrsqrt.pop %v1619
        %v1636 = vrsqrt.pop %v1620
        %v1637 = vrsqrt.pop %v1621
        %v1638 = vmul.f32 %v1590, %v1622
        %v1639 = vmul.f32 %v1591, %v1623
        %v1640 = vmul.f32 %v1592, %v1624
        %v1641 = vmul.f32 %v1593, %v1625
        %v1642 = vmul.f32 %v1594, %v1626
        %v1643 = vmul.f32 %v1595, %v1627
        %v1644 = vmul.f32 %v1596, %v1628
        %v1645 = vmul.f32 %v1597, %v1629
        %v1646 = vmul.f32 %v1598, %v1630
        %v1647 = vmul.f32 %v1599, %v1631
        %v1648 = vmul.f32 %v1600, %v1632
        %v1649 = vmul.f32 %v1601, %v1633
        %v1650 = vmul.f32 %v1602, %v1634
        %v1651 = vmul.f32 %v1603, %v1635
        %v1652 = vmul.f32 %v1604, %v1636
        %v1653 = vmul.f32 %v1605, %v1637
        %v1654 = vlaneseq
        %v1655 = vshrl.u32 %v1654, 7
        %v1656 = vsub.s32 7, %v1655
        %v1657 = vrot.slane %v187, %v1656
        %v1658 = vmul.f32 %v1638, %v1657
        %v1659 = vmul.f32 %v1639, %v1657
        %v1660 = vmul.f32 %v1640, %v1657
        %v1661 = vmul.f32 %v1641, %v1657
        %v1662 = vmul.f32 %v1642, %v1657
        %v1663 = vmul.f32 %v1643, %v1657
        %v1664 = vmul.f32 %v1644, %v1657
        %v1665 = vmul.f32 %v1645, %v1657
        %v1666 = vmul.f32 %v1646, %v1657
        %v1667 = vmul.f32 %v1647, %v1657
        %v1668 = vmul.f32 %v1648, %v1657
        %v1669 = vmul.f32 %v1649, %v1657
        %v1670 = vmul.f32 %v1650, %v1657
        %v1671 = vmul.f32 %v1651, %v1657
        %v1672 = vmul.f32 %v1652, %v1657
        %v1673 = vmul.f32 %v1653, %v1657
        %v1674 = vlaneseq
        %v1675 = vshrl.u32 %v1674, 7
        %v1676 = vsub.s32 0, %v1675
        %v1677 = vrot.slane %v188, %v1676
        %v1678 = vadd.f32 %v1658, %v1677
        %v1679 = vadd.f32 %v1659, %v1677
        %v1680 = vadd.f32 %v1660, %v1677
        %v1681 = vadd.f32 %v1661, %v1677
        %v1682 = vadd.f32 %v1662, %v1677
        %v1683 = vadd.f32 %v1663, %v1677
        %v1684 = vadd.f32 %v1664, %v1677
        %v1685 = vadd.f32 %v1665, %v1677
        %v1686 = vadd.f32 %v1666, %v1677
        %v1687 = vadd.f32 %v1667, %v1677
        %v1688 = vadd.f32 %v1668, %v1677
        %v1689 = vadd.f32 %v1669, %v1677
        %v1690 = vadd.f32 %v1670, %v1677
        %v1691 = vadd.f32 %v1671, %v1677
        %v1692 = vadd.f32 %v1672, %v1677
        %v1693 = vadd.f32 %v1673, %v1677
        %v1694 = vmax.f32 %v1678, 0.0
        %v1695 = vmax.f32 %v1679, 0.0
        %v1696 = vmax.f32 %v1680, 0.0
        %v1697 = vmax.f32 %v1681, 0.0
        %v1698 = vmax.f32 %v1682, 0.0
        %v1699 = vmax.f32 %v1683, 0.0
        %v1700 = vmax.f32 %v1684, 0.0
        %v1701 = vmax.f32 %v1685, 0.0
        %v1702 = vmax.f32 %v1686, 0.0
        %v1703 = vmax.f32 %v1687, 0.0
        %v1704 = vmax.f32 %v1688, 0.0
        %v1705 = vmax.f32 %v1689, 0.0
        %v1706 = vmax.f32 %v1690, 0.0
        %v1707 = vmax.f32 %v1691, 0.0
        %v1708 = vmax.f32 %v1692, 0.0
        %v1709 = vmax.f32 %v1693, 0.0
        %1711 = vset.pattern.permute.xlu0 0
        %1712 = vperm.xlu0 %1711, %v188
        %v1713 = vpop.permute.xlu0 %1712
        %v1714 = vrot.slane %v188, 1
        %v1715 = vrot.slane %v1713, 2
        %v1717 = vsel %vm372, %v1714, 0
        %v1720 = vsel %vm372, %v1694, 0
        %v1723 = vsel %vm372, %v1695, 0
        %v1726 = vsel %vm372, %v1696, 0
        %v1729 = vsel %vm372, %v1697, 0
        %v1732 = vsel %vm372, %v1698, 0
        %v1735 = vsel %vm372, %v1699, 0
        %v1738 = vsel %vm372, %v1700, 0
        %v1741 = vsel %vm372, %v1701, 0
        %v1744 = vsel %vm372, %v1702, 0
        %v1747 = vsel %vm372, %v1703, 0
        %v1750 = vsel %vm372, %v1704, 0
        %v1753 = vsel %vm372, %v1705, 0
        %v1756 = vsel %vm372, %v1706, 0
        %v1759 = vsel %vm372, %v1707, 0
        %v1762 = vsel %vm372, %v1708, 0
        %v1765 = vsel %vm372, %v1709, 0
        %1767 = vmatprep.subr.mxu0 0.0
        %1768 = vmatpush1.xpose.msra.mxu0 %v1720
        %1769 = vmatprep.subr.mxu0 0.0
        %1770 = vmatpush1.xpose.msra.mxu0 %v1723
        %1771 = vmatprep.subr.mxu0 0.0
        %1772 = vmatpush1.xpose.msra.mxu0 %v1726
        %1773 = vmatprep.subr.mxu0 0.0
        %1774 = vmatpush1.xpose.msra.mxu0 %v1729
        %1775 = vmatprep.subr.mxu0 0.0
        %1776 = vmatpush1.xpose.msra.mxu0 %v1732
        %1777 = vmatprep.subr.mxu0 0.0
        %1778 = vmatpush1.xpose.msra.mxu0 %v1735
        %1779 = vmatprep.subr.mxu0 0.0
        %1780 = vmatpush1.xpose.msra.mxu0 %v1738
        %1781 = vmatprep.subr.mxu0 0.0
        %1782 = vmatpush1.xpose.msra.mxu0 %v1741
        %1783 = vmatprep.subr.mxu0 0.0
        %1784 = vmatpush1.xpose.msra.mxu0 %v1744
        %1785 = vmatprep.subr.mxu0 0.0
        %1786 = vmatpush1.xpose.msra.mxu0 %v1747
        %1787 = vmatprep.subr.mxu0 0.0
        %1788 = vmatpush1.xpose.msra.mxu0 %v1750
        %1789 = vmatprep.subr.mxu0 0.0
        %1790 = vmatpush1.xpose.msra.mxu0 %v1753
        %1791 = vmatprep.subr.mxu0 0.0
        %1792 = vmatpush1.xpose.msra.mxu0 %v1756
        %1793 = vmatprep.subr.mxu0 0.0
        %1794 = vmatpush1.xpose.msra.mxu0 %v1759
        %1795 = vmatprep.subr.mxu0 0.0
        %1796 = vmatpush1.xpose.msra.mxu0 %v1762
        %1797 = vmatprep.subr.mxu0 0.0
        %1798 = vmatpush1.xpose.msra.mxu0 %v1765
        %1799 = vmatprep.subr.mxu0 0.0
        %1800 = vmatpush1.xpose.msra.mxu0 0.0
        %1801 = vmatprep.subr.mxu0 0.0
        %1802 = vmatpush1.xpose.msra.mxu0 0.0
        %1803 = vmatprep.subr.mxu0 0.0
        %1804 = vmatpush1.xpose.msra.mxu0 0.0
        %1805 = vmatprep.subr.mxu0 0.0
        %1806 = vmatpush1.xpose.msra.mxu0 0.0
        %1807 = vmatprep.subr.mxu0 0.0
        %1808 = vmatpush1.xpose.msra.mxu0 0.0
        %1809 = vmatprep.subr.mxu0 0.0
        %1810 = vmatpush1.xpose.msra.mxu0 0.0
        %1811 = vmatprep.subr.mxu0 0.0
        %1812 = vmatpush1.xpose.msra.mxu0 0.0
        %1813 = vmatprep.subr.mxu0 0.0
        %1814 = vmatpush1.xpose.msra.mxu0 0.0
        %1815 = vmatprep.subr.mxu0 0.0
        %1816 = vmatpush1.xpose.msra.mxu0 0.0
        %1817 = vmatprep.subr.mxu0 0.0
        %1818 = vmatpush1.xpose.msra.mxu0 0.0
        %1819 = vmatprep.subr.mxu0 0.0
        %1820 = vmatpush1.xpose.msra.mxu0 0.0
        %1821 = vmatprep.subr.mxu0 0.0
        %1822 = vmatpush1.xpose.msra.mxu0 0.0
        %1823 = vmatprep.subr.mxu0 0.0
        %1824 = vmatpush1.xpose.msra.mxu0 0.0
        %1825 = vmatprep.subr.mxu0 0.0
        %1826 = vmatpush1.xpose.msra.mxu0 0.0
        %1827 = vmatprep.subr.mxu0 0.0
        %1828 = vmatpush1.xpose.msra.mxu0 0.0
        %1829 = vmatprep.subr.mxu0 0.0
        %1830 = vmatpush1.xpose.msra.mxu0 0.0
        %1831 = vmatprep.mubr.f32.mxu0 0.0
        %1832 = vmatmul.mubr.f32.gmra.mrb[0].mxu0 %v1717
        %v1833 = vpop.f32.mrb[0].mxu0
        %v1834 = vadd.f32 %v1715, %v1833
        %v1835 = vpop.f32.mrb[0].mxu0
        %1836 = vdwg.mxu0
        %1837 = vst [vmem:[%s163] sm:$0x1] %v1834
        %s1838 = sand.u32 %s93, 1
        %s1839 = scalar_lea.sflag [#allocation3], %s1838
        %s1840 = sand.u32 %s93, 1
        %s1841 = scalar_lea.vmem [#allocation2], %s1840
        // Predicated region
        $region33: #{_critic_pallas.1} parent=31 // pred_check
          %p1842 = pneg %p103
        $region34: #{_critic_pallas.1} parent=31 // pred_check_branch
          %1844 = sbr.rel (%p1842) target = $region36
        $region35: #{_critic_pallas.1} parent=31 // pred_region
          %s1846 = ssub.s32 16, 16
          %1847 = vsyncadd %s1839, %s1846
          %s1848 = smul.addr %s17, 16
          %s1849 = scalar_lea.hbm %s3, %s1848
          %s1851 = sshll.u32 %s1841, 4
          %s1852 = int_to_ptr.vmem [resolvable:$true] %s1851
          %1854 = dma.vmem_to_hbm [thread:$0]  %s1852, 16, %s1849, %s1839
        $region36: #{_critic_pallas.1} parent=31 // pred_fallthru
          _
      $region32: #{_critic_pallas.1} parent=5 // pred_fallthru
        _
      %p1855 = scmp.le.s32.totalorder 2, %s12
      // Predicated region
      $region37: #{_critic_pallas.1} parent=5 // pred_check
        %p1856 = pneg %p1855
      $region38: #{_critic_pallas.1} parent=5 // pred_check_branch
        %1858 = sbr.rel (%p1856) target = $region40
      $region39: #{_critic_pallas.1} parent=5 // pred_region
        %s1859 = ssub.s32 %s12, 2
        // Predicated region
        $region41: #{_critic_pallas.1} parent=39 // pred_check
          %p1860 = pneg %p109
        $region42: #{_critic_pallas.1} parent=39 // pred_check_branch
          %1862 = sbr.rel (%p1860) target = $region44
        $region43: #{_critic_pallas.1} parent=39 // pred_region
          %s1863 = sand.u32 %s94, 1
          %s1864 = scalar_lea.sflag [#allocation3], %s1863
          %s1865 = sand.u32 %s94, 1
          %s1866 = scalar_lea.vmem [#allocation2], %s1865
          %1867 = dma.done %s1864, 16
        $region44: #{_critic_pallas.1} parent=39 // pred_fallthru
          _
      $region40: #{_critic_pallas.1} parent=5 // pred_fallthru
        _
    $region6: #{_critic_pallas.1} parent=1 // loop_footer
      %s16 = sadd.s32 1, %s12
    $region7: #{_critic_pallas.1} parent=1 // loop_footer_branch
      %11 = sbr.rel target = $region3
    $region8: #{_critic_pallas.1} parent=1 // loop_exit
      _
    %1868 = vsyncpa [#allocation3], 1
    %s1869 = scalar_lea.sflag [#allocation3], 1
    %1870 = vsyncpa %s1869, 1

</llo_original>
